<compile_context>
chip_gen: v7x
topology: tpu7x:2x2x1
jax: 0.10.0
libtpu: 0.0.40
codegen_flags: <defaults>
</compile_context>

<pallas_src>
import functools

import jax
import jax.numpy as jnp
from jax.experimental import pallas as pl
from jax.experimental.pallas import tpu as pltpu


def _bilstm_kernel(x_ref, wx_ref, wh_ref, b_ref,
                   out_ref, hN_ref, cN_ref,
                   xg_ref, *, T, Bp, H, unroll):
    """Fused bidirectional LSTM over a fully VMEM-resident sequence.

    x_ref   : (T*Bp, 2E)  time-major [x_t | x_{T-1-t}] (row = t*Bp + b)
    wx_ref  : (2E, 8H)    block-structured input->gates weights, both directions,
                          gate columns permuted to [i_f,i_b,f_f,f_b,o_f,o_b,g_f,g_b]
    wh_ref  : (2H, 8H)    block-diagonal hidden->gates weights, both directions
    b_ref   : (1, 8H)     combined biases (b_ih + b_hh), both directions
    out_ref : (T*Bp, 2H)  packed per-step hidden [fwd | bwd] (row = t*Bp + b)
    hN_ref  : (Bp, 2H)    final hidden states [h_fwd | h_bwd]
    cN_ref  : (Bp, 2H)    final cell states   [c_fwd | c_bwd]
    xg_ref  : (T*Bp, 8H)  VMEM scratch: time-merged gate preactivations
    """
    # (1) Hoisted, lane-dense input projection for the whole sequence.  Because x_ref already
    #     carries both timelines and wx is block-structured, the result is time-merged:
    #     fwd gate columns of row (t, b) use x_t, bwd gate columns use x_{T-1-t}.
    xg = jnp.dot(x_ref[...], wx_ref[...], preferred_element_type=jnp.float32) + b_ref[...]
    xg_ref[...] = xg                                      # single unmasked slab store

    # (2) In-kernel recurrence: one aligned load + one MXU matmul per step.
    def step(s, carry):
        h, c = carry                                      # (Bp, 2H): [fwd | bwd]
        r_f = pl.multiple_of(s * Bp, Bp)
        gates = xg_ref[pl.ds(r_f, Bp), :] + jnp.dot(
            h, wh_ref[...], preferred_element_type=jnp.float32)
        sig = jax.nn.sigmoid(gates[:, :6 * H])            # i, f, o (both directions)
        g_g = jnp.tanh(gates[:, 6 * H:])                  # g      (both directions)
        i_g = sig[:, 0:2 * H]
        f_g = sig[:, 2 * H:4 * H]
        o_g = sig[:, 4 * H:6 * H]
        c_new = f_g * c + i_g * g_g
        h_new = o_g * jnp.tanh(c_new)
        # Forward hidden belongs to time s, backward hidden to time T-1-s.
        r_b = pl.multiple_of((T - 1 - s) * Bp, Bp)
        out_ref[pl.ds(r_f, Bp), :H] = h_new[:, :H]
        out_ref[pl.ds(r_b, Bp), H:] = h_new[:, H:]
        return h_new, c_new

    h0 = jnp.zeros((Bp, 2 * H), jnp.float32)
    c0 = jnp.zeros((Bp, 2 * H), jnp.float32)
    h_fin, c_fin = jax.lax.fori_loop(0, T, step, (h0, c0), unroll=unroll)
    hN_ref[...] = h_fin
    cN_ref[...] = c_fin


def _pack_weights(params, projection_dtype):
    """PyTorch-layout LSTM params -> fused, gate-permuted Pallas operands."""
    H = params["w_hh_f"].shape[1]
    E = params["w_ih_f"].shape[1]

    def interleave(wf, wb):
        # wf/wb have trailing dim 4H in PyTorch gate order (i, f, g, o);
        # emit columns [i_f, i_b, f_f, f_b, o_f, o_b, g_f, g_b].
        i_f, f_f, g_f, o_f = (wf[..., k * H:(k + 1) * H] for k in range(4))
        i_b, f_b, g_b, o_b = (wb[..., k * H:(k + 1) * H] for k in range(4))
        return jnp.concatenate([i_f, i_b, f_f, f_b, o_f, o_b, g_f, g_b], axis=-1)

    # Input->gates, block-structured over x_cat = [x_t | x_{T-1-t}]: (2E, 8H).
    # fwd gate columns read only rows [0:E], bwd gate columns only rows [E:2E].
    zero_e = jnp.zeros((E, 4 * H), jnp.float32)
    wx = interleave(jnp.concatenate([params["w_ih_f"].T, zero_e], axis=0),
                    jnp.concatenate([zero_e, params["w_ih_b"].T], axis=0)
                    ).astype(projection_dtype)

    # Hidden->gates, block-diagonal over the lane-packed hidden state [h_f | h_b]: (2H, 8H).
    zero_h = jnp.zeros((H, 4 * H), jnp.float32)
    wh = interleave(jnp.concatenate([params["w_hh_f"].T, zero_h], axis=0),
                    jnp.concatenate([zero_h, params["w_hh_b"].T], axis=0)).astype(jnp.float32)

    # Combined biases, folded into the input projection: (1, 8H).
    bias = interleave((params["b_ih_f"] + params["b_hh_f"])[None, :],
                      (params["b_ih_b"] + params["b_hh_b"])[None, :]).astype(jnp.float32)
    return wx, wh, bias


def bilstm_encoder_forward(token_ids, params, *, projection_dtype=jnp.float32):
    """Pallas implementation of BiLSTMEncoder.forward.

    token_ids: (B, T) int32
    returns: (out (B, T, 2H), (h_n (2, B, H), c_n (2, B, H)))  -- PyTorch layout/semantics.

    projection_dtype: set jnp.bfloat16 on v6e/v7x to halve the x/wx footprint (the MXU
    accumulates in f32; recurrent state and elementwise math stay f32).
    """
    B, T = token_ids.shape
    E = params["embedding"].shape[1]
    H = params["w_hh_f"].shape[1]
    G = 8 * H

    # Pad the batch to a full sublane tile; padded rows are independent and sliced off below.
    Bp = ((B + 7) // 8) * 8
    ids_p = jnp.pad(token_ids, ((0, Bp - B), (0, 0)))                    # (Bp, T), pads with 0

    # Embedding lookup (gather) stays in plain JAX glue, emitted time-major.  The wrapper also
    # supplies the time-reversed copy so the kernel never has to reverse/select inside the
    # recurrence: x_cat row (t, b) = [embed(x_t) | embed(x_{T-1-t})].
    ids_tm = ids_p.T                                                     # (T, Bp)
    x_tm = jnp.take(params["embedding"], ids_tm.reshape(-1), axis=0
                    ).astype(jnp.float32).reshape(T, Bp, E)
    x_cat = jnp.concatenate([x_tm, x_tm[::-1]], axis=-1
                            ).reshape(T * Bp, 2 * E).astype(projection_dtype)

    wx, wh, bias = _pack_weights(params, projection_dtype)

    # Explicit VMEM budget (inputs/outputs double-buffered by the pipeline, + xg scratch).
    in_bytes = 2 if projection_dtype == jnp.bfloat16 else 4
    vmem_est = (2 * in_bytes * (T * Bp * 2 * E + 2 * E * G)
                + 2 * 4 * (2 * H * G + G)
                + 2 * 4 * (T * Bp * 2 * H + 2 * Bp * 2 * H)
                + 4 * T * Bp * G
                + (4 << 20))                                             # headroom
    vmem_limit = max(vmem_est, 16 << 20)

    unroll = max(1, min(T, 8))
    kernel = functools.partial(_bilstm_kernel, T=T, Bp=Bp, H=H, unroll=unroll)
    out_tm, hN, cN = pl.pallas_call(
        kernel,
        out_shape=(jax.ShapeDtypeStruct((T * Bp, 2 * H), jnp.float32),
                   jax.ShapeDtypeStruct((Bp, 2 * H), jnp.float32),
                   jax.ShapeDtypeStruct((Bp, 2 * H), jnp.float32)),
        grid_spec=pltpu.PrefetchScalarGridSpec(
            num_scalar_prefetch=0,
            grid=(1,),                       # single invocation; time loop lives in-kernel
            in_specs=[
                pl.BlockSpec((T * Bp, 2 * E), lambda i: (0, 0)),
                pl.BlockSpec((2 * E, G), lambda i: (0, 0)),
                pl.BlockSpec((2 * H, G), lambda i: (0, 0)),
                pl.BlockSpec((1, G), lambda i: (0, 0)),
            ],
            out_specs=[
                pl.BlockSpec((T * Bp, 2 * H), lambda i: (0, 0)),
                pl.BlockSpec((Bp, 2 * H), lambda i: (0, 0)),
                pl.BlockSpec((Bp, 2 * H), lambda i: (0, 0)),
            ],
            scratch_shapes=[pltpu.VMEM((T * Bp, G), jnp.float32)],
        ),
        compiler_params=pltpu.CompilerParams(
            dimension_semantics=("arbitrary",),
            vmem_limit_bytes=int(vmem_limit)),
    )(x_cat, wx, wh, bias)

    # Layout plumbing back to PyTorch conventions (cheap XLA glue; no concatenate pass).
    out = jnp.transpose(out_tm.reshape(T, Bp, 2 * H), (1, 0, 2))[:B]     # (B, T, 2H)
    h_n = jnp.stack([hN[:B, :H], hN[:B, H:]], axis=0)                    # (2, B, H)
    c_n = jnp.stack([cN[:B, :H], cN[:B, H:]], axis=0)                    # (2, B, H)
    return out, (h_n, c_n)


# ----------------------- pure-JAX reference (for verification) -----------------------
def _lstm_ref(embeds, w_ih, w_hh, b_ih, b_hh):
    H = w_hh.shape[1]
    B = embeds.shape[0]

    def step(carry, x_t):
        h, c = carry
        gates = x_t @ w_ih.T + b_ih + h @ w_hh.T + b_hh
        i = jax.nn.sigmoid(gates[:, 0 * H:1 * H])
        f = jax.nn.sigmoid(gates[:, 1 * H:2 * H])
        g = jnp.tanh(gates[:, 2 * H:3 * H])
        o = jax.nn.sigmoid(gates[:, 3 * H:4 * H])
        c = f * c + i * g
        h = o * jnp.tanh(c)
        return (h, c), h

    init = (jnp.zeros((B, H), jnp.float32), jnp.zeros((B, H), jnp.float32))
    (hN, cN), hs = jax.lax.scan(step, init, jnp.swapaxes(embeds, 0, 1))
    return jnp.swapaxes(hs, 0, 1), hN, cN


def _bilstm_ref(token_ids, params):
    embeds = jnp.take(params["embedding"], token_ids, axis=0)
    out_f, h_f, c_f = _lstm_ref(embeds, params["w_ih_f"], params["w_hh_f"],
                                params["b_ih_f"], params["b_hh_f"])
    out_b_rev, h_b, c_b = _lstm_ref(jnp.flip(embeds, 1), params["w_ih_b"], params["w_hh_b"],
                                    params["b_ih_b"], params["b_hh_b"])
    out = jnp.concatenate([out_f, jnp.flip(out_b_rev, 1)], axis=-1)
    return out, (jnp.stack([h_f, h_b], 0), jnp.stack([c_f, c_b], 0))


if __name__ == "__main__":
    # Small, deterministic setup consistent with the module:
    # vocab=50 GloVe rows, embedding_dim=32, hidden_dim=32 (=> 16 per direction), batch=2, seq=8.
    vocab_size, embedding_dim, hidden_dim = 50, 32, 32
    H = hidden_dim // 2
    B, T = 2, 8

    key = jax.random.PRNGKey(0)
    keys = jax.random.split(key, 10)
    scale = 1.0 / jnp.sqrt(H)
    params = {
        "embedding": jax.random.normal(keys[0], (vocab_size, embedding_dim), jnp.float32),
        "w_ih_f": jax.random.uniform(keys[1], (4 * H, embedding_dim), jnp.float32, -scale, scale),
        "w_hh_f": jax.random.uniform(keys[2], (4 * H, H), jnp.float32, -scale, scale),
        "b_ih_f": jax.random.uniform(keys[3], (4 * H,), jnp.float32, -scale, scale),
        "b_hh_f": jax.random.uniform(keys[4], (4 * H,), jnp.float32, -scale, scale),
        "w_ih_b": jax.random.uniform(keys[5], (4 * H, embedding_dim), jnp.float32, -scale, scale),
        "w_hh_b": jax.random.uniform(keys[6], (4 * H, H), jnp.float32, -scale, scale),
        "b_ih_b": jax.random.uniform(keys[7], (4 * H,), jnp.float32, -scale, scale),
        "b_hh_b": jax.random.uniform(keys[8], (4 * H,), jnp.float32, -scale, scale),
    }
    token_ids = jax.random.randint(keys[9], (B, T), 0, vocab_size, jnp.int32)

    out_r, (h_r, c_r) = _bilstm_ref(token_ids, params)

    # f32 path (exact vs reference).
    fwd = jax.jit(bilstm_encoder_forward)
    out, (h_n, c_n) = jax.block_until_ready(fwd(token_ids, params))
    assert out.shape == (B, T, hidden_dim)
    assert h_n.shape == (2, B, H) and c_n.shape == (2, B, H)
    assert jnp.allclose(out, out_r, atol=2e-5), "out mismatch vs reference"
    assert jnp.allclose(h_n, h_r, atol=2e-5), "h_n mismatch vs reference"
    assert jnp.allclose(c_n, c_r, atol=2e-5), "c_n mismatch vs reference"

    # bf16-projection path (v6e/v7x footprint/throughput option): loose tolerance.
    fwd16 = jax.jit(functools.partial(bilstm_encoder_forward, projection_dtype=jnp.bfloat16))
    out16, (h16, c16) = jax.block_until_ready(fwd16(token_ids, params))
    assert jnp.allclose(out16, out_r, atol=5e-2), "bf16-projection out mismatch vs reference"
    assert jnp.allclose(h16, h_r, atol=5e-2), "bf16-projection h_n mismatch vs reference"

    print("KERNEL_OK")
</pallas_src>

<mosaic_0001>
module attributes {stable_mosaic.version = 11 : i64} {
  func.func @_bilstm_kernel(%arg0: i32, %arg1: memref<64x64xf32, #tpu.memory_space<vmem>>, %arg2: memref<64x128xf32, #tpu.memory_space<vmem>>, %arg3: memref<32x128xf32, #tpu.memory_space<vmem>>, %arg4: memref<1x128xf32, #tpu.memory_space<vmem>>, %arg5: memref<64x32xf32, #tpu.memory_space<vmem>>, %arg6: memref<8x32xf32, #tpu.memory_space<vmem>>, %arg7: memref<8x32xf32, #tpu.memory_space<vmem>>, %arg8: memref<64x128xf32, #tpu.memory_space<vmem>>) attributes {dimension_semantics = [#tpu.dimension_semantics<arbitrary>], iteration_bounds = array<i64: 1>, scalar_prefetch = 0 : i64, scratch_operands = 1 : i64, tpu.core_type = #tpu.core_type<tc>, window_params = [{pipeline_mode = #tpu.pipeline_mode<synchronous>, transform_indices = @transform_0, window_bounds = array<i64: 64, 64>}, {pipeline_mode = #tpu.pipeline_mode<synchronous>, transform_indices = @transform_1, window_bounds = array<i64: 64, 128>}, {pipeline_mode = #tpu.pipeline_mode<synchronous>, transform_indices = @transform_2, window_bounds = array<i64: 32, 128>}, {pipeline_mode = #tpu.pipeline_mode<synchronous>, transform_indices = @transform_3, window_bounds = array<i64: 1, 128>}, {pipeline_mode = #tpu.pipeline_mode<synchronous>, transform_indices = @transform_4, window_bounds = array<i64: 64, 32>}, {pipeline_mode = #tpu.pipeline_mode<synchronous>, transform_indices = @transform_5, window_bounds = array<i64: 8, 32>}, {pipeline_mode = #tpu.pipeline_mode<synchronous>, transform_indices = @transform_6, window_bounds = array<i64: 8, 32>}]} {
    %c0 = arith.constant 0 : index
    %c0_0 = arith.constant 0 : index
    %0 = vector.load %arg1[%c0, %c0_0] : memref<64x64xf32, #tpu.memory_space<vmem>>, vector<64x64xf32>
    %c0_1 = arith.constant 0 : index
    %c0_2 = arith.constant 0 : index
    %1 = vector.load %arg2[%c0_1, %c0_2] : memref<64x128xf32, #tpu.memory_space<vmem>>, vector<64x128xf32>
    %cst = arith.constant dense<0.000000e+00> : vector<64x128xf32>
    %2 = tpu.matmul %0, %1, %cst {dimension_numbers = #tpu.dot_dimension_numbers<[1], [0], [0], [1], [0, 0, 1, 1], [], []>} : vector<64x64xf32>, vector<64x128xf32>, vector<64x128xf32> -> vector<64x128xf32>
    %c0_3 = arith.constant 0 : index
    %c0_4 = arith.constant 0 : index
    %3 = vector.load %arg4[%c0_3, %c0_4] : memref<1x128xf32, #tpu.memory_space<vmem>>, vector<1x128xf32>
    %4 = vector.broadcast %3 : vector<1x128xf32> to vector<64x128xf32>
    %5 = arith.addf %2, %4 : vector<64x128xf32>
    %c0_5 = arith.constant 0 : index
    %c0_6 = arith.constant 0 : index
    %6 = vector.load %arg8[%c0_5, %c0_6] : memref<64x128xf32, #tpu.memory_space<vmem>>, vector<64x128xf32>
    tpu.vector_store %arg8[%c0_5, %c0_6], %5 {strides = array<i32>} : memref<64x128xf32, #tpu.memory_space<vmem>>, vector<64x128xf32>,
    %cst_7 = arith.constant 0.000000e+00 : f32
    %7 = vector.broadcast %cst_7 : f32 to vector<8x32xf32>
    %cst_8 = arith.constant 0.000000e+00 : f32
    %8 = vector.broadcast %cst_8 : f32 to vector<8x32xf32>
    %c0_i32 = arith.constant 0 : i32
    %c8_i32 = arith.constant 8 : i32
    %9 = arith.muli %c0_i32, %c8_i32 : i32
    %10 = tpu.assume_multiple %9, 8 : i32
    %11 = arith.index_cast %10 : i32 to index
    %c0_9 = arith.constant 0 : index
    %12 = vector.load %arg8[%11, %c0_9] : memref<64x128xf32, #tpu.memory_space<vmem>>, vector<8x128xf32>
    %c0_10 = arith.constant 0 : index
    %c0_11 = arith.constant 0 : index
    %13 = vector.load %arg3[%c0_10, %c0_11] : memref<32x128xf32, #tpu.memory_space<vmem>>, vector<32x128xf32>
    %cst_12 = arith.constant dense<0.000000e+00> : vector<8x128xf32>
    %14 = tpu.matmul %7, %13, %cst_12 {dimension_numbers = #tpu.dot_dimension_numbers<[1], [0], [0], [1], [0, 0, 1, 1], [], []>} : vector<8x32xf32>, vector<32x128xf32>, vector<8x128xf32> -> vector<8x128xf32>
    %15 = arith.addf %12, %14 : vector<8x128xf32>
    %16 = vector.extract_strided_slice %15 {offsets = [0, 0], sizes = [8, 96], strides = [1, 1]} : vector<8x128xf32> to vector<8x96xf32>
    %17 = arith.negf %16 : vector<8x96xf32>
    %18 = math.exp %17 : vector<8x96xf32>
    %cst_13 = arith.constant 1.000000e+00 : f32
    %19 = vector.broadcast %cst_13 : f32 to vector<8x96xf32>
    %20 = arith.addf %19, %18 : vector<8x96xf32>
    %21 = arith.divf %19, %20 : vector<8x96xf32>
    %22 = vector.extract_strided_slice %15 {offsets = [0, 96], sizes = [8, 32], strides = [1, 1]} : vector<8x128xf32> to vector<8x32xf32>
    %23 = math.tanh %22 : vector<8x32xf32>
    %24 = vector.extract_strided_slice %21 {offsets = [0, 0], sizes = [8, 32], strides = [1, 1]} : vector<8x96xf32> to vector<8x32xf32>
    %25 = vector.extract_strided_slice %21 {offsets = [0, 32], sizes = [8, 32], strides = [1, 1]} : vector<8x96xf32> to vector<8x32xf32>
    %26 = vector.extract_strided_slice %21 {offsets = [0, 64], sizes = [8, 32], strides = [1, 1]} : vector<8x96xf32> to vector<8x32xf32>
    %27 = arith.mulf %25, %8 : vector<8x32xf32>
    %28 = arith.mulf %24, %23 : vector<8x32xf32>
    %29 = arith.addf %27, %28 : vector<8x32xf32>
    %30 = math.tanh %29 : vector<8x32xf32>
    %31 = arith.mulf %26, %30 : vector<8x32xf32>
    %c7_i32 = arith.constant 7 : i32
    %32 = arith.subi %c7_i32, %c0_i32 : i32
    %c8_i32_14 = arith.constant 8 : i32
    %33 = arith.muli %32, %c8_i32_14 : i32
    %34 = tpu.assume_multiple %33, 8 : i32
    %35 = vector.extract_strided_slice %31 {offsets = [0, 0], sizes = [8, 16], strides = [1, 1]} : vector<8x32xf32> to vector<8x16xf32>
    %36 = arith.index_cast %10 : i32 to index
    %c0_15 = arith.constant 0 : index
    %37 = vector.load %arg5[%36, %c0_15] : memref<64x32xf32, #tpu.memory_space<vmem>>, vector<8x16xf32>
    tpu.vector_store %arg5[%36, %c0_15], %35 {strides = array<i32>} : memref<64x32xf32, #tpu.memory_space<vmem>>, vector<8x16xf32>,
    %38 = vector.extract_strided_slice %31 {offsets = [0, 16], sizes = [8, 16], strides = [1, 1]} : vector<8x32xf32> to vector<8x16xf32>
    %39 = arith.index_cast %34 : i32 to index
    %c16 = arith.constant 16 : index
    %40 = vector.load %arg5[%39, %c16] : memref<64x32xf32, #tpu.memory_space<vmem>>, vector<8x16xf32>
    tpu.vector_store %arg5[%39, %c16], %38 {strides = array<i32>} : memref<64x32xf32, #tpu.memory_space<vmem>>, vector<8x16xf32>,
    %c1_i32 = arith.constant 1 : i32
    %c8_i32_16 = arith.constant 8 : i32
    %41 = arith.muli %c1_i32, %c8_i32_16 : i32
    %42 = tpu.assume_multiple %41, 8 : i32
    %43 = arith.index_cast %42 : i32 to index
    %c0_17 = arith.constant 0 : index
    %44 = vector.load %arg8[%43, %c0_17] : memref<64x128xf32, #tpu.memory_space<vmem>>, vector<8x128xf32>
    %c0_18 = arith.constant 0 : index
    %c0_19 = arith.constant 0 : index
    %45 = vector.load %arg3[%c0_18, %c0_19] : memref<32x128xf32, #tpu.memory_space<vmem>>, vector<32x128xf32>
    %cst_20 = arith.constant dense<0.000000e+00> : vector<8x128xf32>
    %46 = tpu.matmul %31, %45, %cst_20 {dimension_numbers = #tpu.dot_dimension_numbers<[1], [0], [0], [1], [0, 0, 1, 1], [], []>} : vector<8x32xf32>, vector<32x128xf32>, vector<8x128xf32> -> vector<8x128xf32>
    %47 = arith.addf %44, %46 : vector<8x128xf32>
    %48 = vector.extract_strided_slice %47 {offsets = [0, 0], sizes = [8, 96], strides = [1, 1]} : vector<8x128xf32> to vector<8x96xf32>
    %49 = arith.negf %48 : vector<8x96xf32>
    %50 = math.exp %49 : vector<8x96xf32>
    %cst_21 = arith.constant 1.000000e+00 : f32
    %51 = vector.broadcast %cst_21 : f32 to vector<8x96xf32>
    %52 = arith.addf %51, %50 : vector<8x96xf32>
    %53 = arith.divf %51, %52 : vector<8x96xf32>
    %54 = vector.extract_strided_slice %47 {offsets = [0, 96], sizes = [8, 32], strides = [1, 1]} : vector<8x128xf32> to vector<8x32xf32>
    %55 = math.tanh %54 : vector<8x32xf32>
    %56 = vector.extract_strided_slice %53 {offsets = [0, 0], sizes = [8, 32], strides = [1, 1]} : vector<8x96xf32> to vector<8x32xf32>
    %57 = vector.extract_strided_slice %53 {offsets = [0, 32], sizes = [8, 32], strides = [1, 1]} : vector<8x96xf32> to vector<8x32xf32>
    %58 = vector.extract_strided_slice %53 {offsets = [0, 64], sizes = [8, 32], strides = [1, 1]} : vector<8x96xf32> to vector<8x32xf32>
    %59 = arith.mulf %57, %29 : vector<8x32xf32>
    %60 = arith.mulf %56, %55 : vector<8x32xf32>
    %61 = arith.addf %59, %60 : vector<8x32xf32>
    %62 = math.tanh %61 : vector<8x32xf32>
    %63 = arith.mulf %58, %62 : vector<8x32xf32>
    %c7_i32_22 = arith.constant 7 : i32
    %64 = arith.subi %c7_i32_22, %c1_i32 : i32
    %c8_i32_23 = arith.constant 8 : i32
    %65 = arith.muli %64, %c8_i32_23 : i32
    %66 = tpu.assume_multiple %65, 8 : i32
    %67 = vector.extract_strided_slice %63 {offsets = [0, 0], sizes = [8, 16], strides = [1, 1]} : vector<8x32xf32> to vector<8x16xf32>
    %68 = arith.index_cast %42 : i32 to index
    %c0_24 = arith.constant 0 : index
    %69 = vector.load %arg5[%68, %c0_24] : memref<64x32xf32, #tpu.memory_space<vmem>>, vector<8x16xf32>
    tpu.vector_store %arg5[%68, %c0_24], %67 {strides = array<i32>} : memref<64x32xf32, #tpu.memory_space<vmem>>, vector<8x16xf32>,
    %70 = vector.extract_strided_slice %63 {offsets = [0, 16], sizes = [8, 16], strides = [1, 1]} : vector<8x32xf32> to vector<8x16xf32>
    %71 = arith.index_cast %66 : i32 to index
    %c16_25 = arith.constant 16 : index
    %72 = vector.load %arg5[%71, %c16_25] : memref<64x32xf32, #tpu.memory_space<vmem>>, vector<8x16xf32>
    tpu.vector_store %arg5[%71, %c16_25], %70 {strides = array<i32>} : memref<64x32xf32, #tpu.memory_space<vmem>>, vector<8x16xf32>,
    %c2_i32 = arith.constant 2 : i32
    %c8_i32_26 = arith.constant 8 : i32
    %73 = arith.muli %c2_i32, %c8_i32_26 : i32
    %74 = tpu.assume_multiple %73, 8 : i32
    %75 = arith.index_cast %74 : i32 to index
    %c0_27 = arith.constant 0 : index
    %76 = vector.load %arg8[%75, %c0_27] : memref<64x128xf32, #tpu.memory_space<vmem>>, vector<8x128xf32>
    %c0_28 = arith.constant 0 : index
    %c0_29 = arith.constant 0 : index
    %77 = vector.load %arg3[%c0_28, %c0_29] : memref<32x128xf32, #tpu.memory_space<vmem>>, vector<32x128xf32>
    %cst_30 = arith.constant dense<0.000000e+00> : vector<8x128xf32>
    %78 = tpu.matmul %63, %77, %cst_30 {dimension_numbers = #tpu.dot_dimension_numbers<[1], [0], [0], [1], [0, 0, 1, 1], [], []>} : vector<8x32xf32>, vector<32x128xf32>, vector<8x128xf32> -> vector<8x128xf32>
    %79 = arith.addf %76, %78 : vector<8x128xf32>
    %80 = vector.extract_strided_slice %79 {offsets = [0, 0], sizes = [8, 96], strides = [1, 1]} : vector<8x128xf32> to vector<8x96xf32>
    %81 = arith.negf %80 : vector<8x96xf32>
    %82 = math.exp %81 : vector<8x96xf32>
    %cst_31 = arith.constant 1.000000e+00 : f32
    %83 = vector.broadcast %cst_31 : f32 to vector<8x96xf32>
    %84 = arith.addf %83, %82 : vector<8x96xf32>
    %85 = arith.divf %83, %84 : vector<8x96xf32>
    %86 = vector.extract_strided_slice %79 {offsets = [0, 96], sizes = [8, 32], strides = [1, 1]} : vector<8x128xf32> to vector<8x32xf32>
    %87 = math.tanh %86 : vector<8x32xf32>
    %88 = vector.extract_strided_slice %85 {offsets = [0, 0], sizes = [8, 32], strides = [1, 1]} : vector<8x96xf32> to vector<8x32xf32>
    %89 = vector.extract_strided_slice %85 {offsets = [0, 32], sizes = [8, 32], strides = [1, 1]} : vector<8x96xf32> to vector<8x32xf32>
    %90 = vector.extract_strided_slice %85 {offsets = [0, 64], sizes = [8, 32], strides = [1, 1]} : vector<8x96xf32> to vector<8x32xf32>
    %91 = arith.mulf %89, %61 : vector<8x32xf32>
    %92 = arith.mulf %88, %87 : vector<8x32xf32>
    %93 = arith.addf %91, %92 : vector<8x32xf32>
    %94 = math.tanh %93 : vector<8x32xf32>
    %95 = arith.mulf %90, %94 : vector<8x32xf32>
    %c7_i32_32 = arith.constant 7 : i32
    %96 = arith.subi %c7_i32_32, %c2_i32 : i32
    %c8_i32_33 = arith.constant 8 : i32
    %97 = arith.muli %96, %c8_i32_33 : i32
    %98 = tpu.assume_multiple %97, 8 : i32
    %99 = vector.extract_strided_slice %95 {offsets = [0, 0], sizes = [8, 16], strides = [1, 1]} : vector<8x32xf32> to vector<8x16xf32>
    %100 = arith.index_cast %74 : i32 to index
    %c0_34 = arith.constant 0 : index
    %101 = vector.load %arg5[%100, %c0_34] : memref<64x32xf32, #tpu.memory_space<vmem>>, vector<8x16xf32>
    tpu.vector_store %arg5[%100, %c0_34], %99 {strides = array<i32>} : memref<64x32xf32, #tpu.memory_space<vmem>>, vector<8x16xf32>,
    %102 = vector.extract_strided_slice %95 {offsets = [0, 16], sizes = [8, 16], strides = [1, 1]} : vector<8x32xf32> to vector<8x16xf32>
    %103 = arith.index_cast %98 : i32 to index
    %c16_35 = arith.constant 16 : index
    %104 = vector.load %arg5[%103, %c16_35] : memref<64x32xf32, #tpu.memory_space<vmem>>, vector<8x16xf32>
    tpu.vector_store %arg5[%103, %c16_35], %102 {strides = array<i32>} : memref<64x32xf32, #tpu.memory_space<vmem>>, vector<8x16xf32>,
    %c3_i32 = arith.constant 3 : i32
    %c8_i32_36 = arith.constant 8 : i32
    %105 = arith.muli %c3_i32, %c8_i32_36 : i32
    %106 = tpu.assume_multiple %105, 8 : i32
    %107 = arith.index_cast %106 : i32 to index
    %c0_37 = arith.constant 0 : index
    %108 = vector.load %arg8[%107, %c0_37] : memref<64x128xf32, #tpu.memory_space<vmem>>, vector<8x128xf32>
    %c0_38 = arith.constant 0 : index
    %c0_39 = arith.constant 0 : index
    %109 = vector.load %arg3[%c0_38, %c0_39] : memref<32x128xf32, #tpu.memory_space<vmem>>, vector<32x128xf32>
    %cst_40 = arith.constant dense<0.000000e+00> : vector<8x128xf32>
    %110 = tpu.matmul %95, %109, %cst_40 {dimension_numbers = #tpu.dot_dimension_numbers<[1], [0], [0], [1], [0, 0, 1, 1], [], []>} : vector<8x32xf32>, vector<32x128xf32>, vector<8x128xf32> -> vector<8x128xf32>
    %111 = arith.addf %108, %110 : vector<8x128xf32>
    %112 = vector.extract_strided_slice %111 {offsets = [0, 0], sizes = [8, 96], strides = [1, 1]} : vector<8x128xf32> to vector<8x96xf32>
    %113 = arith.negf %112 : vector<8x96xf32>
    %114 = math.exp %113 : vector<8x96xf32>
    %cst_41 = arith.constant 1.000000e+00 : f32
    %115 = vector.broadcast %cst_41 : f32 to vector<8x96xf32>
    %116 = arith.addf %115, %114 : vector<8x96xf32>
    %117 = arith.divf %115, %116 : vector<8x96xf32>
    %118 = vector.extract_strided_slice %111 {offsets = [0, 96], sizes = [8, 32], strides = [1, 1]} : vector<8x128xf32> to vector<8x32xf32>
    %119 = math.tanh %118 : vector<8x32xf32>
    %120 = vector.extract_strided_slice %117 {offsets = [0, 0], sizes = [8, 32], strides = [1, 1]} : vector<8x96xf32> to vector<8x32xf32>
    %121 = vector.extract_strided_slice %117 {offsets = [0, 32], sizes = [8, 32], strides = [1, 1]} : vector<8x96xf32> to vector<8x32xf32>
    %122 = vector.extract_strided_slice %117 {offsets = [0, 64], sizes = [8, 32], strides = [1, 1]} : vector<8x96xf32> to vector<8x32xf32>
    %123 = arith.mulf %121, %93 : vector<8x32xf32>
    %124 = arith.mulf %120, %119 : vector<8x32xf32>
    %125 = arith.addf %123, %124 : vector<8x32xf32>
    %126 = math.tanh %125 : vector<8x32xf32>
    %127 = arith.mulf %122, %126 : vector<8x32xf32>
    %c7_i32_42 = arith.constant 7 : i32
    %128 = arith.subi %c7_i32_42, %c3_i32 : i32
    %c8_i32_43 = arith.constant 8 : i32
    %129 = arith.muli %128, %c8_i32_43 : i32
    %130 = tpu.assume_multiple %129, 8 : i32
    %131 = vector.extract_strided_slice %127 {offsets = [0, 0], sizes = [8, 16], strides = [1, 1]} : vector<8x32xf32> to vector<8x16xf32>
    %132 = arith.index_cast %106 : i32 to index
    %c0_44 = arith.constant 0 : index
    %133 = vector.load %arg5[%132, %c0_44] : memref<64x32xf32, #tpu.memory_space<vmem>>, vector<8x16xf32>
    tpu.vector_store %arg5[%132, %c0_44], %131 {strides = array<i32>} : memref<64x32xf32, #tpu.memory_space<vmem>>, vector<8x16xf32>,
    %134 = vector.extract_strided_slice %127 {offsets = [0, 16], sizes = [8, 16], strides = [1, 1]} : vector<8x32xf32> to vector<8x16xf32>
    %135 = arith.index_cast %130 : i32 to index
    %c16_45 = arith.constant 16 : index
    %136 = vector.load %arg5[%135, %c16_45] : memref<64x32xf32, #tpu.memory_space<vmem>>, vector<8x16xf32>
    tpu.vector_store %arg5[%135, %c16_45], %134 {strides = array<i32>} : memref<64x32xf32, #tpu.memory_space<vmem>>, vector<8x16xf32>,
    %c4_i32 = arith.constant 4 : i32
    %c8_i32_46 = arith.constant 8 : i32
    %137 = arith.muli %c4_i32, %c8_i32_46 : i32
    %138 = tpu.assume_multiple %137, 8 : i32
    %139 = arith.index_cast %138 : i32 to index
    %c0_47 = arith.constant 0 : index
    %140 = vector.load %arg8[%139, %c0_47] : memref<64x128xf32, #tpu.memory_space<vmem>>, vector<8x128xf32>
    %c0_48 = arith.constant 0 : index
    %c0_49 = arith.constant 0 : index
    %141 = vector.load %arg3[%c0_48, %c0_49] : memref<32x128xf32, #tpu.memory_space<vmem>>, vector<32x128xf32>
    %cst_50 = arith.constant dense<0.000000e+00> : vector<8x128xf32>
    %142 = tpu.matmul %127, %141, %cst_50 {dimension_numbers = #tpu.dot_dimension_numbers<[1], [0], [0], [1], [0, 0, 1, 1], [], []>} : vector<8x32xf32>, vector<32x128xf32>, vector<8x128xf32> -> vector<8x128xf32>
    %143 = arith.addf %140, %142 : vector<8x128xf32>
    %144 = vector.extract_strided_slice %143 {offsets = [0, 0], sizes = [8, 96], strides = [1, 1]} : vector<8x128xf32> to vector<8x96xf32>
    %145 = arith.negf %144 : vector<8x96xf32>
    %146 = math.exp %145 : vector<8x96xf32>
    %cst_51 = arith.constant 1.000000e+00 : f32
    %147 = vector.broadcast %cst_51 : f32 to vector<8x96xf32>
    %148 = arith.addf %147, %146 : vector<8x96xf32>
    %149 = arith.divf %147, %148 : vector<8x96xf32>
    %150 = vector.extract_strided_slice %143 {offsets = [0, 96], sizes = [8, 32], strides = [1, 1]} : vector<8x128xf32> to vector<8x32xf32>
    %151 = math.tanh %150 : vector<8x32xf32>
    %152 = vector.extract_strided_slice %149 {offsets = [0, 0], sizes = [8, 32], strides = [1, 1]} : vector<8x96xf32> to vector<8x32xf32>
    %153 = vector.extract_strided_slice %149 {offsets = [0, 32], sizes = [8, 32], strides = [1, 1]} : vector<8x96xf32> to vector<8x32xf32>
    %154 = vector.extract_strided_slice %149 {offsets = [0, 64], sizes = [8, 32], strides = [1, 1]} : vector<8x96xf32> to vector<8x32xf32>
    %155 = arith.mulf %153, %125 : vector<8x32xf32>
    %156 = arith.mulf %152, %151 : vector<8x32xf32>
    %157 = arith.addf %155, %156 : vector<8x32xf32>
    %158 = math.tanh %157 : vector<8x32xf32>
    %159 = arith.mulf %154, %158 : vector<8x32xf32>
    %c7_i32_52 = arith.constant 7 : i32
    %160 = arith.subi %c7_i32_52, %c4_i32 : i32
    %c8_i32_53 = arith.constant 8 : i32
    %161 = arith.muli %160, %c8_i32_53 : i32
    %162 = tpu.assume_multiple %161, 8 : i32
    %163 = vector.extract_strided_slice %159 {offsets = [0, 0], sizes = [8, 16], strides = [1, 1]} : vector<8x32xf32> to vector<8x16xf32>
    %164 = arith.index_cast %138 : i32 to index
    %c0_54 = arith.constant 0 : index
    %165 = vector.load %arg5[%164, %c0_54] : memref<64x32xf32, #tpu.memory_space<vmem>>, vector<8x16xf32>
    tpu.vector_store %arg5[%164, %c0_54], %163 {strides = array<i32>} : memref<64x32xf32, #tpu.memory_space<vmem>>, vector<8x16xf32>,
    %166 = vector.extract_strided_slice %159 {offsets = [0, 16], sizes = [8, 16], strides = [1, 1]} : vector<8x32xf32> to vector<8x16xf32>
    %167 = arith.index_cast %162 : i32 to index
    %c16_55 = arith.constant 16 : index
    %168 = vector.load %arg5[%167, %c16_55] : memref<64x32xf32, #tpu.memory_space<vmem>>, vector<8x16xf32>
    tpu.vector_store %arg5[%167, %c16_55], %166 {strides = array<i32>} : memref<64x32xf32, #tpu.memory_space<vmem>>, vector<8x16xf32>,
    %c5_i32 = arith.constant 5 : i32
    %c8_i32_56 = arith.constant 8 : i32
    %169 = arith.muli %c5_i32, %c8_i32_56 : i32
    %170 = tpu.assume_multiple %169, 8 : i32
    %171 = arith.index_cast %170 : i32 to index
    %c0_57 = arith.constant 0 : index
    %172 = vector.load %arg8[%171, %c0_57] : memref<64x128xf32, #tpu.memory_space<vmem>>, vector<8x128xf32>
    %c0_58 = arith.constant 0 : index
    %c0_59 = arith.constant 0 : index
    %173 = vector.load %arg3[%c0_58, %c0_59] : memref<32x128xf32, #tpu.memory_space<vmem>>, vector<32x128xf32>
    %cst_60 = arith.constant dense<0.000000e+00> : vector<8x128xf32>
    %174 = tpu.matmul %159, %173, %cst_60 {dimension_numbers = #tpu.dot_dimension_numbers<[1], [0], [0], [1], [0, 0, 1, 1], [], []>} : vector<8x32xf32>, vector<32x128xf32>, vector<8x128xf32> -> vector<8x128xf32>
    %175 = arith.addf %172, %174 : vector<8x128xf32>
    %176 = vector.extract_strided_slice %175 {offsets = [0, 0], sizes = [8, 96], strides = [1, 1]} : vector<8x128xf32> to vector<8x96xf32>
    %177 = arith.negf %176 : vector<8x96xf32>
    %178 = math.exp %177 : vector<8x96xf32>
    %cst_61 = arith.constant 1.000000e+00 : f32
    %179 = vector.broadcast %cst_61 : f32 to vector<8x96xf32>
    %180 = arith.addf %179, %178 : vector<8x96xf32>
    %181 = arith.divf %179, %180 : vector<8x96xf32>
    %182 = vector.extract_strided_slice %175 {offsets = [0, 96], sizes = [8, 32], strides = [1, 1]} : vector<8x128xf32> to vector<8x32xf32>
    %183 = math.tanh %182 : vector<8x32xf32>
    %184 = vector.extract_strided_slice %181 {offsets = [0, 0], sizes = [8, 32], strides = [1, 1]} : vector<8x96xf32> to vector<8x32xf32>
    %185 = vector.extract_strided_slice %181 {offsets = [0, 32], sizes = [8, 32], strides = [1, 1]} : vector<8x96xf32> to vector<8x32xf32>
    %186 = vector.extract_strided_slice %181 {offsets = [0, 64], sizes = [8, 32], strides = [1, 1]} : vector<8x96xf32> to vector<8x32xf32>
    %187 = arith.mulf %185, %157 : vector<8x32xf32>
    %188 = arith.mulf %184, %183 : vector<8x32xf32>
    %189 = arith.addf %187, %188 : vector<8x32xf32>
    %190 = math.tanh %189 : vector<8x32xf32>
    %191 = arith.mulf %186, %190 : vector<8x32xf32>
    %c7_i32_62 = arith.constant 7 : i32
    %192 = arith.subi %c7_i32_62, %c5_i32 : i32
    %c8_i32_63 = arith.constant 8 : i32
    %193 = arith.muli %192, %c8_i32_63 : i32
    %194 = tpu.assume_multiple %193, 8 : i32
    %195 = vector.extract_strided_slice %191 {offsets = [0, 0], sizes = [8, 16], strides = [1, 1]} : vector<8x32xf32> to vector<8x16xf32>
    %196 = arith.index_cast %170 : i32 to index
    %c0_64 = arith.constant 0 : index
    %197 = vector.load %arg5[%196, %c0_64] : memref<64x32xf32, #tpu.memory_space<vmem>>, vector<8x16xf32>
    tpu.vector_store %arg5[%196, %c0_64], %195 {strides = array<i32>} : memref<64x32xf32, #tpu.memory_space<vmem>>, vector<8x16xf32>,
    %198 = vector.extract_strided_slice %191 {offsets = [0, 16], sizes = [8, 16], strides = [1, 1]} : vector<8x32xf32> to vector<8x16xf32>
    %199 = arith.index_cast %194 : i32 to index
    %c16_65 = arith.constant 16 : index
    %200 = vector.load %arg5[%199, %c16_65] : memref<64x32xf32, #tpu.memory_space<vmem>>, vector<8x16xf32>
    tpu.vector_store %arg5[%199, %c16_65], %198 {strides = array<i32>} : memref<64x32xf32, #tpu.memory_space<vmem>>, vector<8x16xf32>,
    %c6_i32 = arith.constant 6 : i32
    %c8_i32_66 = arith.constant 8 : i32
    %201 = arith.muli %c6_i32, %c8_i32_66 : i32
    %202 = tpu.assume_multiple %201, 8 : i32
    %203 = arith.index_cast %202 : i32 to index
    %c0_67 = arith.constant 0 : index
    %204 = vector.load %arg8[%203, %c0_67] : memref<64x128xf32, #tpu.memory_space<vmem>>, vector<8x128xf32>
    %c0_68 = arith.constant 0 : index
    %c0_69 = arith.constant 0 : index
    %205 = vector.load %arg3[%c0_68, %c0_69] : memref<32x128xf32, #tpu.memory_space<vmem>>, vector<32x128xf32>
    %cst_70 = arith.constant dense<0.000000e+00> : vector<8x128xf32>
    %206 = tpu.matmul %191, %205, %cst_70 {dimension_numbers = #tpu.dot_dimension_numbers<[1], [0], [0], [1], [0, 0, 1, 1], [], []>} : vector<8x32xf32>, vector<32x128xf32>, vector<8x128xf32> -> vector<8x128xf32>
    %207 = arith.addf %204, %206 : vector<8x128xf32>
    %208 = vector.extract_strided_slice %207 {offsets = [0, 0], sizes = [8, 96], strides = [1, 1]} : vector<8x128xf32> to vector<8x96xf32>
    %209 = arith.negf %208 : vector<8x96xf32>
    %210 = math.exp %209 : vector<8x96xf32>
    %cst_71 = arith.constant 1.000000e+00 : f32
    %211 = vector.broadcast %cst_71 : f32 to vector<8x96xf32>
    %212 = arith.addf %211, %210 : vector<8x96xf32>
    %213 = arith.divf %211, %212 : vector<8x96xf32>
    %214 = vector.extract_strided_slice %207 {offsets = [0, 96], sizes = [8, 32], strides = [1, 1]} : vector<8x128xf32> to vector<8x32xf32>
    %215 = math.tanh %214 : vector<8x32xf32>
    %216 = vector.extract_strided_slice %213 {offsets = [0, 0], sizes = [8, 32], strides = [1, 1]} : vector<8x96xf32> to vector<8x32xf32>
    %217 = vector.extract_strided_slice %213 {offsets = [0, 32], sizes = [8, 32], strides = [1, 1]} : vector<8x96xf32> to vector<8x32xf32>
    %218 = vector.extract_strided_slice %213 {offsets = [0, 64], sizes = [8, 32], strides = [1, 1]} : vector<8x96xf32> to vector<8x32xf32>
    %219 = arith.mulf %217, %189 : vector<8x32xf32>
    %220 = arith.mulf %216, %215 : vector<8x32xf32>
    %221 = arith.addf %219, %220 : vector<8x32xf32>
    %222 = math.tanh %221 : vector<8x32xf32>
    %223 = arith.mulf %218, %222 : vector<8x32xf32>
    %c7_i32_72 = arith.constant 7 : i32
    %224 = arith.subi %c7_i32_72, %c6_i32 : i32
    %c8_i32_73 = arith.constant 8 : i32
    %225 = arith.muli %224, %c8_i32_73 : i32
    %226 = tpu.assume_multiple %225, 8 : i32
    %227 = vector.extract_strided_slice %223 {offsets = [0, 0], sizes = [8, 16], strides = [1, 1]} : vector<8x32xf32> to vector<8x16xf32>
    %228 = arith.index_cast %202 : i32 to index
    %c0_74 = arith.constant 0 : index
    %229 = vector.load %arg5[%228, %c0_74] : memref<64x32xf32, #tpu.memory_space<vmem>>, vector<8x16xf32>
    tpu.vector_store %arg5[%228, %c0_74], %227 {strides = array<i32>} : memref<64x32xf32, #tpu.memory_space<vmem>>, vector<8x16xf32>,
    %230 = vector.extract_strided_slice %223 {offsets = [0, 16], sizes = [8, 16], strides = [1, 1]} : vector<8x32xf32> to vector<8x16xf32>
    %231 = arith.index_cast %226 : i32 to index
    %c16_75 = arith.constant 16 : index
    %232 = vector.load %arg5[%231, %c16_75] : memref<64x32xf32, #tpu.memory_space<vmem>>, vector<8x16xf32>
    tpu.vector_store %arg5[%231, %c16_75], %230 {strides = array<i32>} : memref<64x32xf32, #tpu.memory_space<vmem>>, vector<8x16xf32>,
    %c7_i32_76 = arith.constant 7 : i32
    %c8_i32_77 = arith.constant 8 : i32
    %233 = arith.muli %c7_i32_76, %c8_i32_77 : i32
    %234 = tpu.assume_multiple %233, 8 : i32
    %235 = arith.index_cast %234 : i32 to index
    %c0_78 = arith.constant 0 : index
    %236 = vector.load %arg8[%235, %c0_78] : memref<64x128xf32, #tpu.memory_space<vmem>>, vector<8x128xf32>
    %c0_79 = arith.constant 0 : index
    %c0_80 = arith.constant 0 : index
    %237 = vector.load %arg3[%c0_79, %c0_80] : memref<32x128xf32, #tpu.memory_space<vmem>>, vector<32x128xf32>
    %cst_81 = arith.constant dense<0.000000e+00> : vector<8x128xf32>
    %238 = tpu.matmul %223, %237, %cst_81 {dimension_numbers = #tpu.dot_dimension_numbers<[1], [0], [0], [1], [0, 0, 1, 1], [], []>} : vector<8x32xf32>, vector<32x128xf32>, vector<8x128xf32> -> vector<8x128xf32>
    %239 = arith.addf %236, %238 : vector<8x128xf32>
    %240 = vector.extract_strided_slice %239 {offsets = [0, 0], sizes = [8, 96], strides = [1, 1]} : vector<8x128xf32> to vector<8x96xf32>
    %241 = arith.negf %240 : vector<8x96xf32>
    %242 = math.exp %241 : vector<8x96xf32>
    %cst_82 = arith.constant 1.000000e+00 : f32
    %243 = vector.broadcast %cst_82 : f32 to vector<8x96xf32>
    %244 = arith.addf %243, %242 : vector<8x96xf32>
    %245 = arith.divf %243, %244 : vector<8x96xf32>
    %246 = vector.extract_strided_slice %239 {offsets = [0, 96], sizes = [8, 32], strides = [1, 1]} : vector<8x128xf32> to vector<8x32xf32>
    %247 = math.tanh %246 : vector<8x32xf32>
    %248 = vector.extract_strided_slice %245 {offsets = [0, 0], sizes = [8, 32], strides = [1, 1]} : vector<8x96xf32> to vector<8x32xf32>
    %249 = vector.extract_strided_slice %245 {offsets = [0, 32], sizes = [8, 32], strides = [1, 1]} : vector<8x96xf32> to vector<8x32xf32>
    %250 = vector.extract_strided_slice %245 {offsets = [0, 64], sizes = [8, 32], strides = [1, 1]} : vector<8x96xf32> to vector<8x32xf32>
    %251 = arith.mulf %249, %221 : vector<8x32xf32>
    %252 = arith.mulf %248, %247 : vector<8x32xf32>
    %253 = arith.addf %251, %252 : vector<8x32xf32>
    %254 = math.tanh %253 : vector<8x32xf32>
    %255 = arith.mulf %250, %254 : vector<8x32xf32>
    %c7_i32_83 = arith.constant 7 : i32
    %256 = arith.subi %c7_i32_83, %c7_i32_76 : i32
    %c8_i32_84 = arith.constant 8 : i32
    %257 = arith.muli %256, %c8_i32_84 : i32
    %258 = tpu.assume_multiple %257, 8 : i32
    %259 = vector.extract_strided_slice %255 {offsets = [0, 0], sizes = [8, 16], strides = [1, 1]} : vector<8x32xf32> to vector<8x16xf32>
    %260 = arith.index_cast %234 : i32 to index
    %c0_85 = arith.constant 0 : index
    %261 = vector.load %arg5[%260, %c0_85] : memref<64x32xf32, #tpu.memory_space<vmem>>, vector<8x16xf32>
    tpu.vector_store %arg5[%260, %c0_85], %259 {strides = array<i32>} : memref<64x32xf32, #tpu.memory_space<vmem>>, vector<8x16xf32>,
    %262 = vector.extract_strided_slice %255 {offsets = [0, 16], sizes = [8, 16], strides = [1, 1]} : vector<8x32xf32> to vector<8x16xf32>
    %263 = arith.index_cast %258 : i32 to index
    %c16_86 = arith.constant 16 : index
    %264 = vector.load %arg5[%263, %c16_86] : memref<64x32xf32, #tpu.memory_space<vmem>>, vector<8x16xf32>
    tpu.vector_store %arg5[%263, %c16_86], %262 {strides = array<i32>} : memref<64x32xf32, #tpu.memory_space<vmem>>, vector<8x16xf32>,
    %c8_i32_87 = arith.constant 8 : i32
    %c0_88 = arith.constant 0 : index
    %c0_89 = arith.constant 0 : index
    %265 = vector.load %arg6[%c0_88, %c0_89] : memref<8x32xf32, #tpu.memory_space<vmem>>, vector<8x32xf32>
    tpu.vector_store %arg6[%c0_88, %c0_89], %255 {strides = array<i32>} : memref<8x32xf32, #tpu.memory_space<vmem>>, vector<8x32xf32>,
    %c0_90 = arith.constant 0 : index
    %c0_91 = arith.constant 0 : index
    %266 = vector.load %arg7[%c0_90, %c0_91] : memref<8x32xf32, #tpu.memory_space<vmem>>, vector<8x32xf32>
    tpu.vector_store %arg7[%c0_90, %c0_91], %253 {strides = array<i32>} : memref<8x32xf32, #tpu.memory_space<vmem>>, vector<8x32xf32>,
    return
  }
  func.func @transform_0(%arg0: i32) -> (i32, i32) {
    %c0_i32 = arith.constant 0 : i32
    %c0_i32_0 = arith.constant 0 : i32
    %c0_i32_1 = arith.constant 0 : i32
    return %c0_i32, %c0_i32_0 : i32, i32
  }
  func.func @transform_1(%arg0: i32) -> (i32, i32) {
    %c0_i32 = arith.constant 0 : i32
    %c0_i32_0 = arith.constant 0 : i32
    %c0_i32_1 = arith.constant 0 : i32
    return %c0_i32, %c0_i32_0 : i32, i32
  }
  func.func @transform_2(%arg0: i32) -> (i32, i32) {
    %c0_i32 = arith.constant 0 : i32
    %c0_i32_0 = arith.constant 0 : i32
    %c0_i32_1 = arith.constant 0 : i32
    return %c0_i32, %c0_i32_0 : i32, i32
  }
  func.func @transform_3(%arg0: i32) -> (i32, i32) {
    %c0_i32 = arith.constant 0 : i32
    %c0_i32_0 = arith.constant 0 : i32
    %c0_i32_1 = arith.constant 0 : i32
    return %c0_i32, %c0_i32_0 : i32, i32
  }
  func.func @transform_4(%arg0: i32) -> (i32, i32) {
    %c0_i32 = arith.constant 0 : i32
    %c0_i32_0 = arith.constant 0 : i32
    %c0_i32_1 = arith.constant 0 : i32
    return %c0_i32, %c0_i32_0 : i32, i32
  }
  func.func @transform_5(%arg0: i32) -> (i32, i32) {
    %c0_i32 = arith.constant 0 : i32
    %c0_i32_0 = arith.constant 0 : i32
    %c0_i32_1 = arith.constant 0 : i32
    return %c0_i32, %c0_i32_0 : i32, i32
  }
  func.func @transform_6(%arg0: i32) -> (i32, i32) {
    %c0_i32 = arith.constant 0 : i32
    %c0_i32_0 = arith.constant 0 : i32
    %c0_i32_1 = arith.constant 0 : i32
    return %c0_i32, %c0_i32_0 : i32, i32
  }
}

</mosaic_0001>

<llo_original>
// kernel: bilstm_encoder_forward.1
$region0: #{bilstm_encoder_forward.1}
  #allocation0 [shape = 'u32[]', space=smem, size = 0x4, offset = 0x4, fixed_abs, tag = 'smem constant byte address 0x4 - core index']
  #allocation1 [shape = 'u32[144,128]{1,0:T(1,128)}', space=vmem, size = 0x12000, scoped, tag = 'internal scratch']
  #allocation2 [shape = 'f32[64,128]{1,0:T(8,128)}', space=vmem, size = 0x8000, scoped, tag = 'scratch operand']
  %s0 = inlined_call_operand.vmem [shape: f32[64,64], index: 0, kind: input, shape index: {}]
  %s1 = inlined_call_operand.vmem [shape: f32[64,128], index: 1, kind: input, shape index: {}]
  %s2 = inlined_call_operand.vmem [shape: f32[32,128], index: 2, kind: input, shape index: {}]
  %s3 = inlined_call_operand.vmem [shape: f32[1,128], index: 3, kind: input, shape index: {}]
  %s4 = inlined_call_operand.vmem [shape: f32[64,32], index: 4, kind: output, shape index: {0}]
  %s5 = inlined_call_operand.vmem [shape: f32[8,32], index: 5, kind: output, shape index: {1}]
  %s6 = inlined_call_operand.vmem [shape: f32[8,32], index: 6, kind: output, shape index: {2}]
  %7 = xla_tuple %s4, %s5, %s6
  %s8 = sld [smem:[#allocation0]]
  $region42: #{bilstm_encoder_forward.1} parent=0
    _
  %s10 = ssub.s32 1, %s8
  %s11 = scalar_select 0, %s10, %s8
  // Predicated region
  $region2: #{bilstm_encoder_forward.1} parent=0 // pred_check
    _
  $region3: #{bilstm_encoder_forward.1} parent=0 // pred_check_branch
    %13 = sbr.rel (0) target = $region5
  $region4: #{bilstm_encoder_forward.1} parent=0 // pred_region
    _
  $region5: #{bilstm_encoder_forward.1} parent=0 // pred_fallthru
    _
  // Predicated region
  $region6: #{bilstm_encoder_forward.1} parent=0 // pred_check
    _
  $region7: #{bilstm_encoder_forward.1} parent=0 // pred_check_branch
    %15 = sbr.rel (0) target = $region9
  $region8: #{bilstm_encoder_forward.1} parent=0 // pred_region
    _
  $region9: #{bilstm_encoder_forward.1} parent=0 // pred_fallthru
    _
  // Predicated region
  $region10: #{bilstm_encoder_forward.1} parent=0 // pred_check
    _
  $region11: #{bilstm_encoder_forward.1} parent=0 // pred_check_branch
    %17 = sbr.rel (0) target = $region13
  $region12: #{bilstm_encoder_forward.1} parent=0 // pred_region
    _
  $region13: #{bilstm_encoder_forward.1} parent=0 // pred_fallthru
    _
  // Predicated region
  $region14: #{bilstm_encoder_forward.1} parent=0 // pred_check
    _
  $region15: #{bilstm_encoder_forward.1} parent=0 // pred_check_branch
    %19 = sbr.rel (0) target = $region17
  $region16: #{bilstm_encoder_forward.1} parent=0 // pred_region
    _
  $region17: #{bilstm_encoder_forward.1} parent=0 // pred_fallthru
    _
  %v20 = vld [vmem:[%s0] sm:$0xff]
  %v21 = vld [vmem:[%s0 + $0x8] sm:$0xff]
  %v22 = vld [vmem:[%s0 + $0x10] sm:$0xff]
  %v23 = vld [vmem:[%s0 + $0x18] sm:$0xff]
  %v24 = vld [vmem:[%s0 + $0x20] sm:$0xff]
  %v25 = vld [vmem:[%s0 + $0x28] sm:$0xff]
  %v26 = vld [vmem:[%s0 + $0x30] sm:$0xff]
  %v27 = vld [vmem:[%s0 + $0x38] sm:$0xff]
  %v28 = vld [vmem:[%s1] sm:$0xff]
  %v29 = vld [vmem:[%s1 + $0x8] sm:$0xff]
  %v30 = vld [vmem:[%s1 + $0x10] sm:$0xff]
  %v31 = vld [vmem:[%s1 + $0x18] sm:$0xff]
  %v32 = vld [vmem:[%s1 + $0x20] sm:$0xff]
  %v33 = vld [vmem:[%s1 + $0x28] sm:$0xff]
  %v34 = vld [vmem:[%s1 + $0x30] sm:$0xff]
  %v35 = vld [vmem:[%s1 + $0x38] sm:$0xff]
  %v36 = vld [vmem:[%s3] sm:$0x1]
  %v38 = vlaneseq
  %v39 = vshrl.u32 %v38, 7
  %v40 = vsub.s32 0, %v39
  %v41 = vrot.slane %v36, %v40
  %vm43 = vcmask 523264
  %v45 = vsel %vm43, %v20, 0
  %v48 = vsel %vm43, %v21, 0
  %v51 = vsel %vm43, %v22, 0
  %v54 = vsel %vm43, %v23, 0
  %v57 = vsel %vm43, %v24, 0
  %v60 = vsel %vm43, %v25, 0
  %v63 = vsel %vm43, %v26, 0
  %v66 = vsel %vm43, %v27, 0
  %68 = vmatprep.subr.mxu0 0.0
  %69 = vmatpush1.msra.mxu0 %v28
  %70 = vmatprep.subr.mxu0 0.0
  %71 = vmatpush1.msra.mxu0 %v29
  %72 = vmatprep.subr.mxu0 0.0
  %73 = vmatpush1.msra.mxu0 %v30
  %74 = vmatprep.subr.mxu0 0.0
  %75 = vmatpush1.msra.mxu0 %v31
  %76 = vmatprep.subr.mxu0 0.0
  %77 = vmatpush1.msra.mxu0 %v32
  %78 = vmatprep.subr.mxu0 0.0
  %79 = vmatpush1.msra.mxu0 %v33
  %80 = vmatprep.subr.mxu0 0.0
  %81 = vmatpush1.msra.mxu0 %v34
  %82 = vmatprep.subr.mxu0 0.0
  %83 = vmatpush1.msra.mxu0 %v35
  %84 = vmatprep.subr.mxu0 0.0
  %85 = vmatpush1.msra.mxu0 0.0
  %86 = vmatprep.subr.mxu0 0.0
  %87 = vmatpush1.msra.mxu0 0.0
  %88 = vmatprep.subr.mxu0 0.0
  %89 = vmatpush1.msra.mxu0 0.0
  %90 = vmatprep.subr.mxu0 0.0
  %91 = vmatpush1.msra.mxu0 0.0
  %92 = vmatprep.subr.mxu0 0.0
  %93 = vmatpush1.msra.mxu0 0.0
  %94 = vmatprep.subr.mxu0 0.0
  %95 = vmatpush1.msra.mxu0 0.0
  %96 = vmatprep.subr.mxu0 0.0
  %97 = vmatpush1.msra.mxu0 0.0
  %98 = vmatprep.subr.mxu0 0.0
  %99 = vmatpush1.msra.mxu0 0.0
  %100 = vmatprep.subr.mxu0 0.0
  %101 = vmatpush1.msra.mxu0 0.0
  %102 = vmatprep.subr.mxu0 0.0
  %103 = vmatpush1.msra.mxu0 0.0
  %104 = vmatprep.subr.mxu0 0.0
  %105 = vmatpush1.msra.mxu0 0.0
  %106 = vmatprep.subr.mxu0 0.0
  %107 = vmatpush1.msra.mxu0 0.0
  %108 = vmatprep.subr.mxu0 0.0
  %109 = vmatpush1.msra.mxu0 0.0
  %110 = vmatprep.subr.mxu0 0.0
  %111 = vmatpush1.msra.mxu0 0.0
  %112 = vmatprep.subr.mxu0 0.0
  %113 = vmatpush1.msra.mxu0 0.0
  %114 = vmatprep.subr.mxu0 0.0
  %115 = vmatpush1.msra.mxu0 0.0
  %116 = vmatprep.subr.mxu0 0.0
  %117 = vmatpush1.msra.mxu0 0.0
  %118 = vmatprep.subr.mxu0 0.0
  %119 = vmatpush1.msra.mxu0 0.0
  %120 = vmatprep.subr.mxu0 0.0
  %121 = vmatpush1.msra.mxu0 0.0
  %122 = vmatprep.subr.mxu0 0.0
  %123 = vmatpush1.msra.mxu0 0.0
  %124 = vmatprep.subr.mxu0 0.0
  %125 = vmatpush1.msra.mxu0 0.0
  %126 = vmatprep.subr.mxu0 0.0
  %127 = vmatpush1.msra.mxu0 0.0
  %128 = vmatprep.subr.mxu0 0.0
  %129 = vmatpush1.msra.mxu0 0.0
  %130 = vmatprep.subr.mxu0 0.0
  %131 = vmatpush1.msra.mxu0 0.0
  %132 = vmatprep.mubr.f32.mxu0 0.0
  %133 = vmatmul.mubr.f32.gmra.mrb[0].mxu0 %v45
  %v134 = vpop.f32.mrb[0].mxu0
  %v135 = vadd.f32 %v41, %v134
  %v136 = vpop.f32.mrb[0].mxu0
  %137 = vmatprep.mubr.f32.mxu0 0.0
  %138 = vmatmul.mubr.f32.gmra.mrb[0].mxu0 %v48
  %v139 = vpop.f32.mrb[0].mxu0
  %v140 = vadd.f32 %v41, %v139
  %v141 = vpop.f32.mrb[0].mxu0
  %142 = vmatprep.mubr.f32.mxu0 0.0
  %143 = vmatmul.mubr.f32.gmra.mrb[0].mxu0 %v51
  %v144 = vpop.f32.mrb[0].mxu0
  %v145 = vadd.f32 %v41, %v144
  %v146 = vpop.f32.mrb[0].mxu0
  %147 = vmatprep.mubr.f32.mxu0 0.0
  %148 = vmatmul.mubr.f32.gmra.mrb[0].mxu0 %v54
  %v149 = vpop.f32.mrb[0].mxu0
  %v150 = vadd.f32 %v41, %v149
  %v151 = vpop.f32.mrb[0].mxu0
  %152 = vmatprep.mubr.f32.mxu0 0.0
  %153 = vmatmul.mubr.f32.gmra.mrb[0].mxu0 %v57
  %v154 = vpop.f32.mrb[0].mxu0
  %v155 = vadd.f32 %v41, %v154
  %v156 = vpop.f32.mrb[0].mxu0
  %157 = vmatprep.mubr.f32.mxu0 0.0
  %158 = vmatmul.mubr.f32.gmra.mrb[0].mxu0 %v60
  %v159 = vpop.f32.mrb[0].mxu0
  %v160 = vadd.f32 %v41, %v159
  %v161 = vpop.f32.mrb[0].mxu0
  %162 = vmatprep.mubr.f32.mxu0 0.0
  %163 = vmatmul.mubr.f32.gmra.mrb[0].mxu0 %v63
  %v164 = vpop.f32.mrb[0].mxu0
  %v165 = vadd.f32 %v41, %v164
  %v166 = vpop.f32.mrb[0].mxu0
  %167 = vmatprep.mubr.f32.mxu0 0.0
  %168 = vmatmul.mubr.f32.gmra.mrb[0].mxu0 %v66
  %v169 = vpop.f32.mrb[0].mxu0
  %v170 = vadd.f32 %v41, %v169
  %v171 = vpop.f32.mrb[0].mxu0
  %172 = vdwg.mxu0
  %173 = vst [vmem:[#allocation2] sm:$0xff] %v135
  %174 = vst [vmem:[#allocation2 + $0x8] sm:$0xff] %v140
  %175 = vst [vmem:[#allocation2 + $0x10] sm:$0xff] %v145
  %176 = vst [vmem:[#allocation2 + $0x18] sm:$0xff] %v150
  %177 = vst [vmem:[#allocation2 + $0x20] sm:$0xff] %v155
  %178 = vst [vmem:[#allocation2 + $0x28] sm:$0xff] %v160
  %179 = vst [vmem:[#allocation2 + $0x30] sm:$0xff] %v165
  %180 = vst [vmem:[#allocation2 + $0x38] sm:$0xff] %v170
  %v181 = vld [vmem:[#allocation2] sm:$0xff]
  %v182 = vld [vmem:[%s2] sm:$0xff]
  %v183 = vld [vmem:[%s2 + $0x8] sm:$0xff]
  %v184 = vld [vmem:[%s2 + $0x10] sm:$0xff]
  %v185 = vld [vmem:[%s2 + $0x18] sm:$0xff]
  %vm186 = vcmask 261120
  %v188 = vsel %vm186, 0.0, 0
  %190 = vmatprep.subr.mxu0 0.0
  %191 = vmatpush1.msra.mxu0 %v182
  %192 = vmatprep.subr.mxu0 0.0
  %193 = vmatpush1.msra.mxu0 %v183
  %194 = vmatprep.subr.mxu0 0.0
  %195 = vmatpush1.msra.mxu0 %v184
  %196 = vmatprep.subr.mxu0 0.0
  %197 = vmatpush1.msra.mxu0 %v185
  %198 = vmatprep.subr.mxu0 0.0
  %199 = vmatpush1.msra.mxu0 0.0
  %200 = vmatprep.subr.mxu0 0.0
  %201 = vmatpush1.msra.mxu0 0.0
  %202 = vmatprep.subr.mxu0 0.0
  %203 = vmatpush1.msra.mxu0 0.0
  %204 = vmatprep.subr.mxu0 0.0
  %205 = vmatpush1.msra.mxu0 0.0
  %206 = vmatprep.subr.mxu0 0.0
  %207 = vmatpush1.msra.mxu0 0.0
  %208 = vmatprep.subr.mxu0 0.0
  %209 = vmatpush1.msra.mxu0 0.0
  %210 = vmatprep.subr.mxu0 0.0
  %211 = vmatpush1.msra.mxu0 0.0
  %212 = vmatprep.subr.mxu0 0.0
  %213 = vmatpush1.msra.mxu0 0.0
  %214 = vmatprep.subr.mxu0 0.0
  %215 = vmatpush1.msra.mxu0 0.0
  %216 = vmatprep.subr.mxu0 0.0
  %217 = vmatpush1.msra.mxu0 0.0
  %218 = vmatprep.subr.mxu0 0.0
  %219 = vmatpush1.msra.mxu0 0.0
  %220 = vmatprep.subr.mxu0 0.0
  %221 = vmatpush1.msra.mxu0 0.0
  %222 = vmatprep.subr.mxu0 0.0
  %223 = vmatpush1.msra.mxu0 0.0
  %224 = vmatprep.subr.mxu0 0.0
  %225 = vmatpush1.msra.mxu0 0.0
  %226 = vmatprep.subr.mxu0 0.0
  %227 = vmatpush1.msra.mxu0 0.0
  %228 = vmatprep.subr.mxu0 0.0
  %229 = vmatpush1.msra.mxu0 0.0
  %230 = vmatprep.subr.mxu0 0.0
  %231 = vmatpush1.msra.mxu0 0.0
  %232 = vmatprep.subr.mxu0 0.0
  %233 = vmatpush1.msra.mxu0 0.0
  %234 = vmatprep.subr.mxu0 0.0
  %235 = vmatpush1.msra.mxu0 0.0
  %236 = vmatprep.subr.mxu0 0.0
  %237 = vmatpush1.msra.mxu0 0.0
  %238 = vmatprep.subr.mxu0 0.0
  %239 = vmatpush1.msra.mxu0 0.0
  %240 = vmatprep.subr.mxu0 0.0
  %241 = vmatpush1.msra.mxu0 0.0
  %242 = vmatprep.subr.mxu0 0.0
  %243 = vmatpush1.msra.mxu0 0.0
  %244 = vmatprep.subr.mxu0 0.0
  %245 = vmatpush1.msra.mxu0 0.0
  %246 = vmatprep.subr.mxu0 0.0
  %247 = vmatpush1.msra.mxu0 0.0
  %248 = vmatprep.subr.mxu0 0.0
  %249 = vmatpush1.msra.mxu0 0.0
  %250 = vmatprep.subr.mxu0 0.0
  %251 = vmatpush1.msra.mxu0 0.0
  %252 = vmatprep.subr.mxu0 0.0
  %253 = vmatpush1.msra.mxu0 0.0
  %254 = vmatprep.mubr.f32.mxu0 0.0
  %255 = vmatmul.mubr.f32.gmra.mrb[0].mxu0 %v188
  %v256 = vpop.f32.mrb[0].mxu0
  %v257 = vadd.f32 0.0, %v256
  %v258 = vpop.f32.mrb[0].mxu0
  %259 = vdwg.mxu0
  %v260 = vadd.f32 %v181, %v257
  %v261 = vxor.u32 %v260, 2147483648
  %v262 = vmul.f32 %v261, 1.442695
  %v263 = vpow.pop %v262
  %v264 = vadd.f32 %v263, 1.0
  %v265 = vrcp.pop %v264
  %v266 = vmul.f32 1.0, %v265
  %v267 = vtanh.pop %v260
  %v268 = vmul.f32 %v266, 0.0
  %270 = vrot.lane.b32.xlu0 %v267, 32
  %v271 = vpop.permute.xlu0 %270
  %v273 = vmul.f32 %v266, %v271
  %275 = vrot.lane.b32.xlu0 %v273, 32
  %v276 = vpop.permute.xlu0 %275
  %v278 = vadd.f32 %v268, %v276
  %v279 = vtanh.pop %v278
  %281 = vrot.lane.b32.xlu0 %v279, 32
  %v282 = vpop.permute.xlu0 %281
  %v284 = vmul.f32 %v266, %v282
  %286 = vrot.lane.b32.xlu0 %v284, 64
  %v287 = vpop.permute.xlu0 %286
  %vm289 = vcmask 130048
  %290 = vst.msk [vmem:[%s4] sm:$0xff] %vm289, %v287
  %s291 = scalar_lea.vmem %s4, 56
  %vm292 = vcmask 261248
  %293 = vst.msk [vmem:[%s291] sm:$0xff] %vm292, %v287
  %s294 = scalar_lea.vmem [#allocation2], 8
  %v295 = vld [vmem:[%s294] sm:$0xff]
  %v296 = vld [vmem:[%s2] sm:$0xff]
  %v297 = vld [vmem:[%s2 + $0x8] sm:$0xff]
  %v298 = vld [vmem:[%s2 + $0x10] sm:$0xff]
  %v299 = vld [vmem:[%s2 + $0x18] sm:$0xff]
  %v300 = vsel %vm186, %v287, 0
  %302 = vmatprep.subr.mxu0 0.0
  %303 = vmatpush1.msra.mxu0 %v296
  %304 = vmatprep.subr.mxu0 0.0
  %305 = vmatpush1.msra.mxu0 %v297
  %306 = vmatprep.subr.mxu0 0.0
  %307 = vmatpush1.msra.mxu0 %v298
  %308 = vmatprep.subr.mxu0 0.0
  %309 = vmatpush1.msra.mxu0 %v299
  %310 = vmatprep.subr.mxu0 0.0
  %311 = vmatpush1.msra.mxu0 0.0
  %312 = vmatprep.subr.mxu0 0.0
  %313 = vmatpush1.msra.mxu0 0.0
  %314 = vmatprep.subr.mxu0 0.0
  %315 = vmatpush1.msra.mxu0 0.0
  %316 = vmatprep.subr.mxu0 0.0
  %317 = vmatpush1.msra.mxu0 0.0
  %318 = vmatprep.subr.mxu0 0.0
  %319 = vmatpush1.msra.mxu0 0.0
  %320 = vmatprep.subr.mxu0 0.0
  %321 = vmatpush1.msra.mxu0 0.0
  %322 = vmatprep.subr.mxu0 0.0
  %323 = vmatpush1.msra.mxu0 0.0
  %324 = vmatprep.subr.mxu0 0.0
  %325 = vmatpush1.msra.mxu0 0.0
  %326 = vmatprep.subr.mxu0 0.0
  %327 = vmatpush1.msra.mxu0 0.0
  %328 = vmatprep.subr.mxu0 0.0
  %329 = vmatpush1.msra.mxu0 0.0
  %330 = vmatprep.subr.mxu0 0.0
  %331 = vmatpush1.msra.mxu0 0.0
  %332 = vmatprep.subr.mxu0 0.0
  %333 = vmatpush1.msra.mxu0 0.0
  %334 = vmatprep.subr.mxu0 0.0
  %335 = vmatpush1.msra.mxu0 0.0
  %336 = vmatprep.subr.mxu0 0.0
  %337 = vmatpush1.msra.mxu0 0.0
  %338 = vmatprep.subr.mxu0 0.0
  %339 = vmatpush1.msra.mxu0 0.0
  %340 = vmatprep.subr.mxu0 0.0
  %341 = vmatpush1.msra.mxu0 0.0
  %342 = vmatprep.subr.mxu0 0.0
  %343 = vmatpush1.msra.mxu0 0.0
  %344 = vmatprep.subr.mxu0 0.0
  %345 = vmatpush1.msra.mxu0 0.0
  %346 = vmatprep.subr.mxu0 0.0
  %347 = vmatpush1.msra.mxu0 0.0
  %348 = vmatprep.subr.mxu0 0.0
  %349 = vmatpush1.msra.mxu0 0.0
  %350 = vmatprep.subr.mxu0 0.0
  %351 = vmatpush1.msra.mxu0 0.0
  %352 = vmatprep.subr.mxu0 0.0
  %353 = vmatpush1.msra.mxu0 0.0
  %354 = vmatprep.subr.mxu0 0.0
  %355 = vmatpush1.msra.mxu0 0.0
  %356 = vmatprep.subr.mxu0 0.0
  %357 = vmatpush1.msra.mxu0 0.0
  %358 = vmatprep.subr.mxu0 0.0
  %359 = vmatpush1.msra.mxu0 0.0
  %360 = vmatprep.subr.mxu0 0.0
  %361 = vmatpush1.msra.mxu0 0.0
  %362 = vmatprep.subr.mxu0 0.0
  %363 = vmatpush1.msra.mxu0 0.0
  %364 = vmatprep.subr.mxu0 0.0
  %365 = vmatpush1.msra.mxu0 0.0
  %366 = vmatprep.mubr.f32.mxu0 0.0
  %367 = vmatmul.mubr.f32.gmra.mrb[0].mxu0 %v300
  %v368 = vpop.f32.mrb[0].mxu0
  %v369 = vadd.f32 0.0, %v368
  %v370 = vpop.f32.mrb[0].mxu0
  %371 = vdwg.mxu0
  %v372 = vadd.f32 %v295, %v369
  %v373 = vxor.u32 %v372, 2147483648
  %v374 = vmul.f32 %v373, 1.442695
  %v375 = vpow.pop %v374
  %v376 = vadd.f32 %v375, 1.0
  %v377 = vrcp.pop %v376
  %v378 = vmul.f32 1.0, %v377
  %v379 = vtanh.pop %v372
  %v380 = vmul.f32 %v378, %v278
  %382 = vrot.lane.b32.xlu0 %v379, 32
  %v383 = vpop.permute.xlu0 %382
  %v385 = vmul.f32 %v378, %v383
  %387 = vrot.lane.b32.xlu0 %v385, 32
  %v388 = vpop.permute.xlu0 %387
  %v390 = vadd.f32 %v380, %v388
  %v391 = vtanh.pop %v390
  %393 = vrot.lane.b32.xlu0 %v391, 32
  %v394 = vpop.permute.xlu0 %393
  %v396 = vmul.f32 %v378, %v394
  %398 = vrot.lane.b32.xlu0 %v396, 64
  %v399 = vpop.permute.xlu0 %398
  %s401 = scalar_lea.vmem %s4, 8
  %402 = vst.msk [vmem:[%s401] sm:$0xff] %vm289, %v399
  %s403 = scalar_lea.vmem %s4, 48
  %404 = vst.msk [vmem:[%s403] sm:$0xff] %vm292, %v399
  %s405 = scalar_lea.vmem [#allocation2], 16
  %v406 = vld [vmem:[%s405] sm:$0xff]
  %v407 = vld [vmem:[%s2] sm:$0xff]
  %v408 = vld [vmem:[%s2 + $0x8] sm:$0xff]
  %v409 = vld [vmem:[%s2 + $0x10] sm:$0xff]
  %v410 = vld [vmem:[%s2 + $0x18] sm:$0xff]
  %v411 = vsel %vm186, %v399, 0
  %413 = vmatprep.subr.mxu0 0.0
  %414 = vmatpush1.msra.mxu0 %v407
  %415 = vmatprep.subr.mxu0 0.0
  %416 = vmatpush1.msra.mxu0 %v408
  %417 = vmatprep.subr.mxu0 0.0
  %418 = vmatpush1.msra.mxu0 %v409
  %419 = vmatprep.subr.mxu0 0.0
  %420 = vmatpush1.msra.mxu0 %v410
  %421 = vmatprep.subr.mxu0 0.0
  %422 = vmatpush1.msra.mxu0 0.0
  %423 = vmatprep.subr.mxu0 0.0
  %424 = vmatpush1.msra.mxu0 0.0
  %425 = vmatprep.subr.mxu0 0.0
  %426 = vmatpush1.msra.mxu0 0.0
  %427 = vmatprep.subr.mxu0 0.0
  %428 = vmatpush1.msra.mxu0 0.0
  %429 = vmatprep.subr.mxu0 0.0
  %430 = vmatpush1.msra.mxu0 0.0
  %431 = vmatprep.subr.mxu0 0.0
  %432 = vmatpush1.msra.mxu0 0.0
  %433 = vmatprep.subr.mxu0 0.0
  %434 = vmatpush1.msra.mxu0 0.0
  %435 = vmatprep.subr.mxu0 0.0
  %436 = vmatpush1.msra.mxu0 0.0
  %437 = vmatprep.subr.mxu0 0.0
  %438 = vmatpush1.msra.mxu0 0.0
  %439 = vmatprep.subr.mxu0 0.0
  %440 = vmatpush1.msra.mxu0 0.0
  %441 = vmatprep.subr.mxu0 0.0
  %442 = vmatpush1.msra.mxu0 0.0
  %443 = vmatprep.subr.mxu0 0.0
  %444 = vmatpush1.msra.mxu0 0.0
  %445 = vmatprep.subr.mxu0 0.0
  %446 = vmatpush1.msra.mxu0 0.0
  %447 = vmatprep.subr.mxu0 0.0
  %448 = vmatpush1.msra.mxu0 0.0
  %449 = vmatprep.subr.mxu0 0.0
  %450 = vmatpush1.msra.mxu0 0.0
  %451 = vmatprep.subr.mxu0 0.0
  %452 = vmatpush1.msra.mxu0 0.0
  %453 = vmatprep.subr.mxu0 0.0
  %454 = vmatpush1.msra.mxu0 0.0
  %455 = vmatprep.subr.mxu0 0.0
  %456 = vmatpush1.msra.mxu0 0.0
  %457 = vmatprep.subr.mxu0 0.0
  %458 = vmatpush1.msra.mxu0 0.0
  %459 = vmatprep.subr.mxu0 0.0
  %460 = vmatpush1.msra.mxu0 0.0
  %461 = vmatprep.subr.mxu0 0.0
  %462 = vmatpush1.msra.mxu0 0.0
  %463 = vmatprep.subr.mxu0 0.0
  %464 = vmatpush1.msra.mxu0 0.0
  %465 = vmatprep.subr.mxu0 0.0
  %466 = vmatpush1.msra.mxu0 0.0
  %467 = vmatprep.subr.mxu0 0.0
  %468 = vmatpush1.msra.mxu0 0.0
  %469 = vmatprep.subr.mxu0 0.0
  %470 = vmatpush1.msra.mxu0 0.0
  %471 = vmatprep.subr.mxu0 0.0
  %472 = vmatpush1.msra.mxu0 0.0
  %473 = vmatprep.subr.mxu0 0.0
  %474 = vmatpush1.msra.mxu0 0.0
  %475 = vmatprep.subr.mxu0 0.0
  %476 = vmatpush1.msra.mxu0 0.0
  %477 = vmatprep.mubr.f32.mxu0 0.0
  %478 = vmatmul.mubr.f32.gmra.mrb[0].mxu0 %v411
  %v479 = vpop.f32.mrb[0].mxu0
  %v480 = vadd.f32 0.0, %v479
  %v481 = vpop.f32.mrb[0].mxu0
  %482 = vdwg.mxu0
  %v483 = vadd.f32 %v406, %v480
  %v484 = vxor.u32 %v483, 2147483648
  %v485 = vmul.f32 %v484, 1.442695
  %v486 = vpow.pop %v485
  %v487 = vadd.f32 %v486, 1.0
  %v488 = vrcp.pop %v487
  %v489 = vmul.f32 1.0, %v488
  %v490 = vtanh.pop %v483
  %v491 = vmul.f32 %v489, %v390
  %493 = vrot.lane.b32.xlu0 %v490, 32
  %v494 = vpop.permute.xlu0 %493
  %v496 = vmul.f32 %v489, %v494
  %498 = vrot.lane.b32.xlu0 %v496, 32
  %v499 = vpop.permute.xlu0 %498
  %v501 = vadd.f32 %v491, %v499
  %v502 = vtanh.pop %v501
  %504 = vrot.lane.b32.xlu0 %v502, 32
  %v505 = vpop.permute.xlu0 %504
  %v507 = vmul.f32 %v489, %v505
  %509 = vrot.lane.b32.xlu0 %v507, 64
  %v510 = vpop.permute.xlu0 %509
  %s512 = scalar_lea.vmem %s4, 16
  %513 = vst.msk [vmem:[%s512] sm:$0xff] %vm289, %v510
  %s514 = scalar_lea.vmem %s4, 40
  %515 = vst.msk [vmem:[%s514] sm:$0xff] %vm292, %v510
  %s516 = scalar_lea.vmem [#allocation2], 24
  %v517 = vld [vmem:[%s516] sm:$0xff]
  %v518 = vld [vmem:[%s2] sm:$0xff]
  %v519 = vld [vmem:[%s2 + $0x8] sm:$0xff]
  %v520 = vld [vmem:[%s2 + $0x10] sm:$0xff]
  %v521 = vld [vmem:[%s2 + $0x18] sm:$0xff]
  %v522 = vsel %vm186, %v510, 0
  %524 = vmatprep.subr.mxu0 0.0
  %525 = vmatpush1.msra.mxu0 %v518
  %526 = vmatprep.subr.mxu0 0.0
  %527 = vmatpush1.msra.mxu0 %v519
  %528 = vmatprep.subr.mxu0 0.0
  %529 = vmatpush1.msra.mxu0 %v520
  %530 = vmatprep.subr.mxu0 0.0
  %531 = vmatpush1.msra.mxu0 %v521
  %532 = vmatprep.subr.mxu0 0.0
  %533 = vmatpush1.msra.mxu0 0.0
  %534 = vmatprep.subr.mxu0 0.0
  %535 = vmatpush1.msra.mxu0 0.0
  %536 = vmatprep.subr.mxu0 0.0
  %537 = vmatpush1.msra.mxu0 0.0
  %538 = vmatprep.subr.mxu0 0.0
  %539 = vmatpush1.msra.mxu0 0.0
  %540 = vmatprep.subr.mxu0 0.0
  %541 = vmatpush1.msra.mxu0 0.0
  %542 = vmatprep.subr.mxu0 0.0
  %543 = vmatpush1.msra.mxu0 0.0
  %544 = vmatprep.subr.mxu0 0.0
  %545 = vmatpush1.msra.mxu0 0.0
  %546 = vmatprep.subr.mxu0 0.0
  %547 = vmatpush1.msra.mxu0 0.0
  %548 = vmatprep.subr.mxu0 0.0
  %549 = vmatpush1.msra.mxu0 0.0
  %550 = vmatprep.subr.mxu0 0.0
  %551 = vmatpush1.msra.mxu0 0.0
  %552 = vmatprep.subr.mxu0 0.0
  %553 = vmatpush1.msra.mxu0 0.0
  %554 = vmatprep.subr.mxu0 0.0
  %555 = vmatpush1.msra.mxu0 0.0
  %556 = vmatprep.subr.mxu0 0.0
  %557 = vmatpush1.msra.mxu0 0.0
  %558 = vmatprep.subr.mxu0 0.0
  %559 = vmatpush1.msra.mxu0 0.0
  %560 = vmatprep.subr.mxu0 0.0
  %561 = vmatpush1.msra.mxu0 0.0
  %562 = vmatprep.subr.mxu0 0.0
  %563 = vmatpush1.msra.mxu0 0.0
  %564 = vmatprep.subr.mxu0 0.0
  %565 = vmatpush1.msra.mxu0 0.0
  %566 = vmatprep.subr.mxu0 0.0
  %567 = vmatpush1.msra.mxu0 0.0
  %568 = vmatprep.subr.mxu0 0.0
  %569 = vmatpush1.msra.mxu0 0.0
  %570 = vmatprep.subr.mxu0 0.0
  %571 = vmatpush1.msra.mxu0 0.0
  %572 = vmatprep.subr.mxu0 0.0
  %573 = vmatpush1.msra.mxu0 0.0
  %574 = vmatprep.subr.mxu0 0.0
  %575 = vmatpush1.msra.mxu0 0.0
  %576 = vmatprep.subr.mxu0 0.0
  %577 = vmatpush1.msra.mxu0 0.0
  %578 = vmatprep.subr.mxu0 0.0
  %579 = vmatpush1.msra.mxu0 0.0
  %580 = vmatprep.subr.mxu0 0.0
  %581 = vmatpush1.msra.mxu0 0.0
  %582 = vmatprep.subr.mxu0 0.0
  %583 = vmatpush1.msra.mxu0 0.0
  %584 = vmatprep.subr.mxu0 0.0
  %585 = vmatpush1.msra.mxu0 0.0
  %586 = vmatprep.subr.mxu0 0.0
  %587 = vmatpush1.msra.mxu0 0.0
  %588 = vmatprep.mubr.f32.mxu0 0.0
  %589 = vmatmul.mubr.f32.gmra.mrb[0].mxu0 %v522
  %v590 = vpop.f32.mrb[0].mxu0
  %v591 = vadd.f32 0.0, %v590
  %v592 = vpop.f32.mrb[0].mxu0
  %593 = vdwg.mxu0
  %v594 = vadd.f32 %v517, %v591
  %v595 = vxor.u32 %v594, 2147483648
  %v596 = vmul.f32 %v595, 1.442695
  %v597 = vpow.pop %v596
  %v598 = vadd.f32 %v597, 1.0
  %v599 = vrcp.pop %v598
  %v600 = vmul.f32 1.0, %v599
  %v601 = vtanh.pop %v594
  %v602 = vmul.f32 %v600, %v501
  %604 = vrot.lane.b32.xlu0 %v601, 32
  %v605 = vpop.permute.xlu0 %604
  %v607 = vmul.f32 %v600, %v605
  %609 = vrot.lane.b32.xlu0 %v607, 32
  %v610 = vpop.permute.xlu0 %609
  %v612 = vadd.f32 %v602, %v610
  %v613 = vtanh.pop %v612
  %615 = vrot.lane.b32.xlu0 %v613, 32
  %v616 = vpop.permute.xlu0 %615
  %v618 = vmul.f32 %v600, %v616
  %620 = vrot.lane.b32.xlu0 %v618, 64
  %v621 = vpop.permute.xlu0 %620
  %s623 = scalar_lea.vmem %s4, 24
  %624 = vst.msk [vmem:[%s623] sm:$0xff] %vm289, %v621
  %s625 = scalar_lea.vmem %s4, 32
  %626 = vst.msk [vmem:[%s625] sm:$0xff] %vm292, %v621
  %s627 = scalar_lea.vmem [#allocation2], 32
  %v628 = vld [vmem:[%s627] sm:$0xff]
  %v629 = vld [vmem:[%s2] sm:$0xff]
  %v630 = vld [vmem:[%s2 + $0x8] sm:$0xff]
  %v631 = vld [vmem:[%s2 + $0x10] sm:$0xff]
  %v632 = vld [vmem:[%s2 + $0x18] sm:$0xff]
  %v633 = vsel %vm186, %v621, 0
  %635 = vmatprep.subr.mxu0 0.0
  %636 = vmatpush1.msra.mxu0 %v629
  %637 = vmatprep.subr.mxu0 0.0
  %638 = vmatpush1.msra.mxu0 %v630
  %639 = vmatprep.subr.mxu0 0.0
  %640 = vmatpush1.msra.mxu0 %v631
  %641 = vmatprep.subr.mxu0 0.0
  %642 = vmatpush1.msra.mxu0 %v632
  %643 = vmatprep.subr.mxu0 0.0
  %644 = vmatpush1.msra.mxu0 0.0
  %645 = vmatprep.subr.mxu0 0.0
  %646 = vmatpush1.msra.mxu0 0.0
  %647 = vmatprep.subr.mxu0 0.0
  %648 = vmatpush1.msra.mxu0 0.0
  %649 = vmatprep.subr.mxu0 0.0
  %650 = vmatpush1.msra.mxu0 0.0
  %651 = vmatprep.subr.mxu0 0.0
  %652 = vmatpush1.msra.mxu0 0.0
  %653 = vmatprep.subr.mxu0 0.0
  %654 = vmatpush1.msra.mxu0 0.0
  %655 = vmatprep.subr.mxu0 0.0
  %656 = vmatpush1.msra.mxu0 0.0
  %657 = vmatprep.subr.mxu0 0.0
  %658 = vmatpush1.msra.mxu0 0.0
  %659 = vmatprep.subr.mxu0 0.0
  %660 = vmatpush1.msra.mxu0 0.0
  %661 = vmatprep.subr.mxu0 0.0
  %662 = vmatpush1.msra.mxu0 0.0
  %663 = vmatprep.subr.mxu0 0.0
  %664 = vmatpush1.msra.mxu0 0.0
  %665 = vmatprep.subr.mxu0 0.0
  %666 = vmatpush1.msra.mxu0 0.0
  %667 = vmatprep.subr.mxu0 0.0
  %668 = vmatpush1.msra.mxu0 0.0
  %669 = vmatprep.subr.mxu0 0.0
  %670 = vmatpush1.msra.mxu0 0.0
  %671 = vmatprep.subr.mxu0 0.0
  %672 = vmatpush1.msra.mxu0 0.0
  %673 = vmatprep.subr.mxu0 0.0
  %674 = vmatpush1.msra.mxu0 0.0
  %675 = vmatprep.subr.mxu0 0.0
  %676 = vmatpush1.msra.mxu0 0.0
  %677 = vmatprep.subr.mxu0 0.0
  %678 = vmatpush1.msra.mxu0 0.0
  %679 = vmatprep.subr.mxu0 0.0
  %680 = vmatpush1.msra.mxu0 0.0
  %681 = vmatprep.subr.mxu0 0.0
  %682 = vmatpush1.msra.mxu0 0.0
  %683 = vmatprep.subr.mxu0 0.0
  %684 = vmatpush1.msra.mxu0 0.0
  %685 = vmatprep.subr.mxu0 0.0
  %686 = vmatpush1.msra.mxu0 0.0
  %687 = vmatprep.subr.mxu0 0.0
  %688 = vmatpush1.msra.mxu0 0.0
  %689 = vmatprep.subr.mxu0 0.0
  %690 = vmatpush1.msra.mxu0 0.0
  %691 = vmatprep.subr.mxu0 0.0
  %692 = vmatpush1.msra.mxu0 0.0
  %693 = vmatprep.subr.mxu0 0.0
  %694 = vmatpush1.msra.mxu0 0.0
  %695 = vmatprep.subr.mxu0 0.0
  %696 = vmatpush1.msra.mxu0 0.0
  %697 = vmatprep.subr.mxu0 0.0
  %698 = vmatpush1.msra.mxu0 0.0
  %699 = vmatprep.mubr.f32.mxu0 0.0
  %700 = vmatmul.mubr.f32.gmra.mrb[0].mxu0 %v633
  %v701 = vpop.f32.mrb[0].mxu0
  %v702 = vadd.f32 0.0, %v701
  %v703 = vpop.f32.mrb[0].mxu0
  %704 = vdwg.mxu0
  %v705 = vadd.f32 %v628, %v702
  %v706 = vxor.u32 %v705, 2147483648
  %v707 = vmul.f32 %v706, 1.442695
  %v708 = vpow.pop %v707
  %v709 = vadd.f32 %v708, 1.0
  %v710 = vrcp.pop %v709
  %v711 = vmul.f32 1.0, %v710
  %v712 = vtanh.pop %v705
  %v713 = vmul.f32 %v711, %v612
  %715 = vrot.lane.b32.xlu0 %v712, 32
  %v716 = vpop.permute.xlu0 %715
  %v718 = vmul.f32 %v711, %v716
  %720 = vrot.lane.b32.xlu0 %v718, 32
  %v721 = vpop.permute.xlu0 %720
  %v723 = vadd.f32 %v713, %v721
  %v724 = vtanh.pop %v723
  %726 = vrot.lane.b32.xlu0 %v724, 32
  %v727 = vpop.permute.xlu0 %726
  %v729 = vmul.f32 %v711, %v727
  %731 = vrot.lane.b32.xlu0 %v729, 64
  %v732 = vpop.permute.xlu0 %731
  %734 = vst.msk [vmem:[%s625] sm:$0xff] %vm289, %v732
  %735 = vst.msk [vmem:[%s623] sm:$0xff] %vm292, %v732
  %s736 = scalar_lea.vmem [#allocation2], 40
  %v737 = vld [vmem:[%s736] sm:$0xff]
  %v738 = vld [vmem:[%s2] sm:$0xff]
  %v739 = vld [vmem:[%s2 + $0x8] sm:$0xff]
  %v740 = vld [vmem:[%s2 + $0x10] sm:$0xff]
  %v741 = vld [vmem:[%s2 + $0x18] sm:$0xff]
  %v742 = vsel %vm186, %v732, 0
  %744 = vmatprep.subr.mxu0 0.0
  %745 = vmatpush1.msra.mxu0 %v738
  %746 = vmatprep.subr.mxu0 0.0
  %747 = vmatpush1.msra.mxu0 %v739
  %748 = vmatprep.subr.mxu0 0.0
  %749 = vmatpush1.msra.mxu0 %v740
  %750 = vmatprep.subr.mxu0 0.0
  %751 = vmatpush1.msra.mxu0 %v741
  %752 = vmatprep.subr.mxu0 0.0
  %753 = vmatpush1.msra.mxu0 0.0
  %754 = vmatprep.subr.mxu0 0.0
  %755 = vmatpush1.msra.mxu0 0.0
  %756 = vmatprep.subr.mxu0 0.0
  %757 = vmatpush1.msra.mxu0 0.0
  %758 = vmatprep.subr.mxu0 0.0
  %759 = vmatpush1.msra.mxu0 0.0
  %760 = vmatprep.subr.mxu0 0.0
  %761 = vmatpush1.msra.mxu0 0.0
  %762 = vmatprep.subr.mxu0 0.0
  %763 = vmatpush1.msra.mxu0 0.0
  %764 = vmatprep.subr.mxu0 0.0
  %765 = vmatpush1.msra.mxu0 0.0
  %766 = vmatprep.subr.mxu0 0.0
  %767 = vmatpush1.msra.mxu0 0.0
  %768 = vmatprep.subr.mxu0 0.0
  %769 = vmatpush1.msra.mxu0 0.0
  %770 = vmatprep.subr.mxu0 0.0
  %771 = vmatpush1.msra.mxu0 0.0
  %772 = vmatprep.subr.mxu0 0.0
  %773 = vmatpush1.msra.mxu0 0.0
  %774 = vmatprep.subr.mxu0 0.0
  %775 = vmatpush1.msra.mxu0 0.0
  %776 = vmatprep.subr.mxu0 0.0
  %777 = vmatpush1.msra.mxu0 0.0
  %778 = vmatprep.subr.mxu0 0.0
  %779 = vmatpush1.msra.mxu0 0.0
  %780 = vmatprep.subr.mxu0 0.0
  %781 = vmatpush1.msra.mxu0 0.0
  %782 = vmatprep.subr.mxu0 0.0
  %783 = vmatpush1.msra.mxu0 0.0
  %784 = vmatprep.subr.mxu0 0.0
  %785 = vmatpush1.msra.mxu0 0.0
  %786 = vmatprep.subr.mxu0 0.0
  %787 = vmatpush1.msra.mxu0 0.0
  %788 = vmatprep.subr.mxu0 0.0
  %789 = vmatpush1.msra.mxu0 0.0
  %790 = vmatprep.subr.mxu0 0.0
  %791 = vmatpush1.msra.mxu0 0.0
  %792 = vmatprep.subr.mxu0 0.0
  %793 = vmatpush1.msra.mxu0 0.0
  %794 = vmatprep.subr.mxu0 0.0
  %795 = vmatpush1.msra.mxu0 0.0
  %796 = vmatprep.subr.mxu0 0.0
  %797 = vmatpush1.msra.mxu0 0.0
  %798 = vmatprep.subr.mxu0 0.0
  %799 = vmatpush1.msra.mxu0 0.0
  %800 = vmatprep.subr.mxu0 0.0
  %801 = vmatpush1.msra.mxu0 0.0
  %802 = vmatprep.subr.mxu0 0.0
  %803 = vmatpush1.msra.mxu0 0.0
  %804 = vmatprep.subr.mxu0 0.0
  %805 = vmatpush1.msra.mxu0 0.0
  %806 = vmatprep.subr.mxu0 0.0
  %807 = vmatpush1.msra.mxu0 0.0
  %808 = vmatprep.mubr.f32.mxu0 0.0
  %809 = vmatmul.mubr.f32.gmra.mrb[0].mxu0 %v742
  %v810 = vpop.f32.mrb[0].mxu0
  %v811 = vadd.f32 0.0, %v810
  %v812 = vpop.f32.mrb[0].mxu0
  %813 = vdwg.mxu0
  %v814 = vadd.f32 %v737, %v811
  %v815 = vxor.u32 %v814, 2147483648
  %v816 = vmul.f32 %v815, 1.442695
  %v817 = vpow.pop %v816
  %v818 = vadd.f32 %v817, 1.0
  %v819 = vrcp.pop %v818
  %v820 = vmul.f32 1.0, %v819
  %v821 = vtanh.pop %v814
  %v822 = vmul.f32 %v820, %v723
  %824 = vrot.lane.b32.xlu0 %v821, 32
  %v825 = vpop.permute.xlu0 %824
  %v827 = vmul.f32 %v820, %v825
  %829 = vrot.lane.b32.xlu0 %v827, 32
  %v830 = vpop.permute.xlu0 %829
  %v832 = vadd.f32 %v822, %v830
  %v833 = vtanh.pop %v832
  %835 = vrot.lane.b32.xlu0 %v833, 32
  %v836 = vpop.permute.xlu0 %835
  %v838 = vmul.f32 %v820, %v836
  %840 = vrot.lane.b32.xlu0 %v838, 64
  %v841 = vpop.permute.xlu0 %840
  %843 = vst.msk [vmem:[%s514] sm:$0xff] %vm289, %v841
  %844 = vst.msk [vmem:[%s512] sm:$0xff] %vm292, %v841
  %s845 = scalar_lea.vmem [#allocation2], 48
  %v846 = vld [vmem:[%s845] sm:$0xff]
  %v847 = vld [vmem:[%s2] sm:$0xff]
  %v848 = vld [vmem:[%s2 + $0x8] sm:$0xff]
  %v849 = vld [vmem:[%s2 + $0x10] sm:$0xff]
  %v850 = vld [vmem:[%s2 + $0x18] sm:$0xff]
  %v851 = vsel %vm186, %v841, 0
  %853 = vmatprep.subr.mxu0 0.0
  %854 = vmatpush1.msra.mxu0 %v847
  %855 = vmatprep.subr.mxu0 0.0
  %856 = vmatpush1.msra.mxu0 %v848
  %857 = vmatprep.subr.mxu0 0.0
  %858 = vmatpush1.msra.mxu0 %v849
  %859 = vmatprep.subr.mxu0 0.0
  %860 = vmatpush1.msra.mxu0 %v850
  %861 = vmatprep.subr.mxu0 0.0
  %862 = vmatpush1.msra.mxu0 0.0
  %863 = vmatprep.subr.mxu0 0.0
  %864 = vmatpush1.msra.mxu0 0.0
  %865 = vmatprep.subr.mxu0 0.0
  %866 = vmatpush1.msra.mxu0 0.0
  %867 = vmatprep.subr.mxu0 0.0
  %868 = vmatpush1.msra.mxu0 0.0
  %869 = vmatprep.subr.mxu0 0.0
  %870 = vmatpush1.msra.mxu0 0.0
  %871 = vmatprep.subr.mxu0 0.0
  %872 = vmatpush1.msra.mxu0 0.0
  %873 = vmatprep.subr.mxu0 0.0
  %874 = vmatpush1.msra.mxu0 0.0
  %875 = vmatprep.subr.mxu0 0.0
  %876 = vmatpush1.msra.mxu0 0.0
  %877 = vmatprep.subr.mxu0 0.0
  %878 = vmatpush1.msra.mxu0 0.0
  %879 = vmatprep.subr.mxu0 0.0
  %880 = vmatpush1.msra.mxu0 0.0
  %881 = vmatprep.subr.mxu0 0.0
  %882 = vmatpush1.msra.mxu0 0.0
  %883 = vmatprep.subr.mxu0 0.0
  %884 = vmatpush1.msra.mxu0 0.0
  %885 = vmatprep.subr.mxu0 0.0
  %886 = vmatpush1.msra.mxu0 0.0
  %887 = vmatprep.subr.mxu0 0.0
  %888 = vmatpush1.msra.mxu0 0.0
  %889 = vmatprep.subr.mxu0 0.0
  %890 = vmatpush1.msra.mxu0 0.0
  %891 = vmatprep.subr.mxu0 0.0
  %892 = vmatpush1.msra.mxu0 0.0
  %893 = vmatprep.subr.mxu0 0.0
  %894 = vmatpush1.msra.mxu0 0.0
  %895 = vmatprep.subr.mxu0 0.0
  %896 = vmatpush1.msra.mxu0 0.0
  %897 = vmatprep.subr.mxu0 0.0
  %898 = vmatpush1.msra.mxu0 0.0
  %899 = vmatprep.subr.mxu0 0.0
  %900 = vmatpush1.msra.mxu0 0.0
  %901 = vmatprep.subr.mxu0 0.0
  %902 = vmatpush1.msra.mxu0 0.0
  %903 = vmatprep.subr.mxu0 0.0
  %904 = vmatpush1.msra.mxu0 0.0
  %905 = vmatprep.subr.mxu0 0.0
  %906 = vmatpush1.msra.mxu0 0.0
  %907 = vmatprep.subr.mxu0 0.0
  %908 = vmatpush1.msra.mxu0 0.0
  %909 = vmatprep.subr.mxu0 0.0
  %910 = vmatpush1.msra.mxu0 0.0
  %911 = vmatprep.subr.mxu0 0.0
  %912 = vmatpush1.msra.mxu0 0.0
  %913 = vmatprep.subr.mxu0 0.0
  %914 = vmatpush1.msra.mxu0 0.0
  %915 = vmatprep.subr.mxu0 0.0
  %916 = vmatpush1.msra.mxu0 0.0
  %917 = vmatprep.mubr.f32.mxu0 0.0
  %918 = vmatmul.mubr.f32.gmra.mrb[0].mxu0 %v851
  %v919 = vpop.f32.mrb[0].mxu0
  %v920 = vadd.f32 0.0, %v919
  %v921 = vpop.f32.mrb[0].mxu0
  %922 = vdwg.mxu0
  %v923 = vadd.f32 %v846, %v920
  %v924 = vxor.u32 %v923, 2147483648
  %v925 = vmul.f32 %v924, 1.442695
  %v926 = vpow.pop %v925
  %v927 = vadd.f32 %v926, 1.0
  %v928 = vrcp.pop %v927
  %v929 = vmul.f32 1.0, %v928
  %v930 = vtanh.pop %v923
  %v931 = vmul.f32 %v929, %v832
  %933 = vrot.lane.b32.xlu0 %v930, 32
  %v934 = vpop.permute.xlu0 %933
  %v936 = vmul.f32 %v929, %v934
  %938 = vrot.lane.b32.xlu0 %v936, 32
  %v939 = vpop.permute.xlu0 %938
  %v941 = vadd.f32 %v931, %v939
  %v942 = vtanh.pop %v941
  %944 = vrot.lane.b32.xlu0 %v942, 32
  %v945 = vpop.permute.xlu0 %944
  %v947 = vmul.f32 %v929, %v945
  %949 = vrot.lane.b32.xlu0 %v947, 64
  %v950 = vpop.permute.xlu0 %949
  %952 = vst.msk [vmem:[%s403] sm:$0xff] %vm289, %v950
  %953 = vst.msk [vmem:[%s401] sm:$0xff] %vm292, %v950
  %s954 = scalar_lea.vmem [#allocation2], 56
  %v955 = vld [vmem:[%s954] sm:$0xff]
  %v956 = vld [vmem:[%s2] sm:$0xff]
  %v957 = vld [vmem:[%s2 + $0x8] sm:$0xff]
  %v958 = vld [vmem:[%s2 + $0x10] sm:$0xff]
  %v959 = vld [vmem:[%s2 + $0x18] sm:$0xff]
  %v960 = vsel %vm186, %v950, 0
  %962 = vmatprep.subr.mxu0 0.0
  %963 = vmatpush1.msra.mxu0 %v956
  %964 = vmatprep.subr.mxu0 0.0
  %965 = vmatpush1.msra.mxu0 %v957
  %966 = vmatprep.subr.mxu0 0.0
  %967 = vmatpush1.msra.mxu0 %v958
  %968 = vmatprep.subr.mxu0 0.0
  %969 = vmatpush1.msra.mxu0 %v959
  %970 = vmatprep.subr.mxu0 0.0
  %971 = vmatpush1.msra.mxu0 0.0
  %972 = vmatprep.subr.mxu0 0.0
  %973 = vmatpush1.msra.mxu0 0.0
  %974 = vmatprep.subr.mxu0 0.0
  %975 = vmatpush1.msra.mxu0 0.0
  %976 = vmatprep.subr.mxu0 0.0
  %977 = vmatpush1.msra.mxu0 0.0
  %978 = vmatprep.subr.mxu0 0.0
  %979 = vmatpush1.msra.mxu0 0.0
  %980 = vmatprep.subr.mxu0 0.0
  %981 = vmatpush1.msra.mxu0 0.0
  %982 = vmatprep.subr.mxu0 0.0
  %983 = vmatpush1.msra.mxu0 0.0
  %984 = vmatprep.subr.mxu0 0.0
  %985 = vmatpush1.msra.mxu0 0.0
  %986 = vmatprep.subr.mxu0 0.0
  %987 = vmatpush1.msra.mxu0 0.0
  %988 = vmatprep.subr.mxu0 0.0
  %989 = vmatpush1.msra.mxu0 0.0
  %990 = vmatprep.subr.mxu0 0.0
  %991 = vmatpush1.msra.mxu0 0.0
  %992 = vmatprep.subr.mxu0 0.0
  %993 = vmatpush1.msra.mxu0 0.0
  %994 = vmatprep.subr.mxu0 0.0
  %995 = vmatpush1.msra.mxu0 0.0
  %996 = vmatprep.subr.mxu0 0.0
  %997 = vmatpush1.msra.mxu0 0.0
  %998 = vmatprep.subr.mxu0 0.0
  %999 = vmatpush1.msra.mxu0 0.0
  %1000 = vmatprep.subr.mxu0 0.0
  %1001 = vmatpush1.msra.mxu0 0.0
  %1002 = vmatprep.subr.mxu0 0.0
  %1003 = vmatpush1.msra.mxu0 0.0
  %1004 = vmatprep.subr.mxu0 0.0
  %1005 = vmatpush1.msra.mxu0 0.0
  %1006 = vmatprep.subr.mxu0 0.0
  %1007 = vmatpush1.msra.mxu0 0.0
  %1008 = vmatprep.subr.mxu0 0.0
  %1009 = vmatpush1.msra.mxu0 0.0
  %1010 = vmatprep.subr.mxu0 0.0
  %1011 = vmatpush1.msra.mxu0 0.0
  %1012 = vmatprep.subr.mxu0 0.0
  %1013 = vmatpush1.msra.mxu0 0.0
  %1014 = vmatprep.subr.mxu0 0.0
  %1015 = vmatpush1.msra.mxu0 0.0
  %1016 = vmatprep.subr.mxu0 0.0
  %1017 = vmatpush1.msra.mxu0 0.0
  %1018 = vmatprep.subr.mxu0 0.0
  %1019 = vmatpush1.msra.mxu0 0.0
  %1020 = vmatprep.subr.mxu0 0.0
  %1021 = vmatpush1.msra.mxu0 0.0
  %1022 = vmatprep.subr.mxu0 0.0
  %1023 = vmatpush1.msra.mxu0 0.0
  %1024 = vmatprep.subr.mxu0 0.0
  %1025 = vmatpush1.msra.mxu0 0.0
  %1026 = vmatprep.mubr.f32.mxu0 0.0
  %1027 = vmatmul.mubr.f32.gmra.mrb[0].mxu0 %v960
  %v1028 = vpop.f32.mrb[0].mxu0
  %v1029 = vadd.f32 0.0, %v1028
  %v1030 = vpop.f32.mrb[0].mxu0
  %1031 = vdwg.mxu0
  %v1032 = vadd.f32 %v955, %v1029
  %v1033 = vxor.u32 %v1032, 2147483648
  %v1034 = vmul.f32 %v1033, 1.442695
  %v1035 = vpow.pop %v1034
  %v1036 = vadd.f32 %v1035, 1.0
  %v1037 = vrcp.pop %v1036
  %v1038 = vmul.f32 1.0, %v1037
  %v1039 = vtanh.pop %v1032
  %v1040 = vmul.f32 %v1038, %v941
  %1042 = vrot.lane.b32.xlu0 %v1039, 32
  %v1043 = vpop.permute.xlu0 %1042
  %v1045 = vmul.f32 %v1038, %v1043
  %1047 = vrot.lane.b32.xlu0 %v1045, 32
  %v1048 = vpop.permute.xlu0 %1047
  %v1050 = vadd.f32 %v1040, %v1048
  %v1051 = vtanh.pop %v1050
  %1053 = vrot.lane.b32.xlu0 %v1051, 32
  %v1054 = vpop.permute.xlu0 %1053
  %v1056 = vmul.f32 %v1038, %v1054
  %1058 = vrot.lane.b32.xlu0 %v1056, 64
  %v1059 = vpop.permute.xlu0 %1058
  %1061 = vst.msk [vmem:[%s291] sm:$0xff] %vm289, %v1059
  %1062 = vst.msk [vmem:[%s4] sm:$0xff] %vm292, %v1059
  %1063 = vst.msk [vmem:[%s5] sm:$0xff] %vm186, %v1059
  %1065 = vrot.lane.b32.xlu0 %v1050, 96
  %v1066 = vpop.permute.xlu0 %1065
  %1068 = vst.msk [vmem:[%s6] sm:$0xff] %vm186, %v1066
  // Predicated region
  $region18: #{bilstm_encoder_forward.1} parent=0 // pred_check
    _
  $region19: #{bilstm_encoder_forward.1} parent=0 // pred_check_branch
    %1070 = sbr.rel (0) target = $region21
  $region20: #{bilstm_encoder_forward.1} parent=0 // pred_region
    _
  $region21: #{bilstm_encoder_forward.1} parent=0 // pred_fallthru
    _
  // Predicated region
  $region22: #{bilstm_encoder_forward.1} parent=0 // pred_check
    _
  $region23: #{bilstm_encoder_forward.1} parent=0 // pred_check_branch
    %1072 = sbr.rel (0) target = $region25
  $region24: #{bilstm_encoder_forward.1} parent=0 // pred_region
    _
  $region25: #{bilstm_encoder_forward.1} parent=0 // pred_fallthru
    _
  // Predicated region
  $region26: #{bilstm_encoder_forward.1} parent=0 // pred_check
    _
  $region27: #{bilstm_encoder_forward.1} parent=0 // pred_check_branch
    %1074 = sbr.rel (0) target = $region29
  $region28: #{bilstm_encoder_forward.1} parent=0 // pred_region
    _
  $region29: #{bilstm_encoder_forward.1} parent=0 // pred_fallthru
    _
  // Predicated region
  $region30: #{bilstm_encoder_forward.1} parent=0 // pred_check
    _
  $region31: #{bilstm_encoder_forward.1} parent=0 // pred_check_branch
    %1076 = sbr.rel (0) target = $region33
  $region32: #{bilstm_encoder_forward.1} parent=0 // pred_region
    _
  $region33: #{bilstm_encoder_forward.1} parent=0 // pred_fallthru
    _
  // Predicated region
  $region34: #{bilstm_encoder_forward.1} parent=0 // pred_check
    _
  $region35: #{bilstm_encoder_forward.1} parent=0 // pred_check_branch
    %1078 = sbr.rel (0) target = $region37
  $region36: #{bilstm_encoder_forward.1} parent=0 // pred_region
    _
  $region37: #{bilstm_encoder_forward.1} parent=0 // pred_fallthru
    _
  // Predicated region
  $region38: #{bilstm_encoder_forward.1} parent=0 // pred_check
    _
  $region39: #{bilstm_encoder_forward.1} parent=0 // pred_check_branch
    %1080 = sbr.rel (0) target = $region41
  $region40: #{bilstm_encoder_forward.1} parent=0 // pred_region
    _
  $region41: #{bilstm_encoder_forward.1} parent=0 // pred_fallthru
    _

</llo_original>
